<compile_context>
chip_gen: v6e
topology: v6e:2x2x1
jax: 0.10.0
libtpu: 0.0.40
codegen_flags: <defaults>
</compile_context>

<pallas_src>
import functools

import jax
import jax.numpy as jnp
from jax import lax
from jax.experimental import pallas as pl
from jax.experimental.pallas import tpu as pltpu

_LANE = 128
_SUBLANE = 8
_SLOPE = 0.01  # nn.LeakyReLU() default negative_slope


def _round_up(v, m):
    return max(m, ((v + m - 1) // m) * m)


def _rnn_seq_kernel(x_ref, h0_ref, wxh_ref, wxo_ref, whh_ref, who_ref, bh_ref, bo_ref,
                    out_ref, hfin_ref,
                    xprojb_ref, hall_ref, h_scr, *, valid_o):
    """x_ref:   (T*Bp, I)   flattened (time-major) padded inputs
       h0_ref:  (Bp, Hp)    initial hidden (lane-padded to 128)
       wxh_ref: (I, Hp)  wxo_ref: (I, Op)  whh_ref: (Hp, Hp)  who_ref: (Hp, Op)
       bh_ref:  (1, Hp)  bo_ref:  (1, Op)
       out_ref: (T*Bp, Op)  log-probs (valid lanes: first `valid_o`)
       hfin_ref:(Bp, Hp)    final hidden
       scratches: xprojb_ref (T*Bp, Hp), hall_ref (T*Bp, Hp), h_scr (Bp, Hp)."""
    TB = x_ref.shape[0]
    Bp, Hp = h0_ref.shape
    Op = who_ref.shape[1]
    T = TB // Bp

    # ---- (1) Hoisted: input->hidden projection + bias for the whole sequence (1 MXU op).
    xprojb_ref[...] = (
        jnp.dot(x_ref[...], wxh_ref[...], preferred_element_type=jnp.float32)
        + jnp.broadcast_to(bh_ref[...], (TB, Hp)))

    # Recurrent weight stays resident in vregs/VMEM across the loop.
    whh = whh_ref[...]
    h_scr[...] = h0_ref[...]

    # ---- (2) Serial recurrence: only h @ Whh per step; stash pre-update hidden.
    def step(t, carry):
        row = pl.multiple_of(t * Bp, Bp)
        h_prev = h_scr[...]
        hall_ref[pl.ds(row, Bp), :] = h_prev                      # lane-dense vst
        pre = (jnp.dot(h_prev, whh, preferred_element_type=jnp.float32)
               + xprojb_ref[pl.ds(row, Bp), :])
        h_scr[...] = jnp.where(pre > 0, pre, _SLOPE * pre)        # LeakyReLU(0.01)
        return carry

    lax.fori_loop(0, T, step, 0, unroll=True)
    hfin_ref[...] = h_scr[...].astype(hfin_ref.dtype)

    # ---- (3) Dense output branch for ALL time steps at once (no serial dependence).
    hall = hall_ref[...]
    o_pre = (jnp.dot(x_ref[...], wxo_ref[...], preferred_element_type=jnp.float32)
             + jnp.dot(hall, who_ref[...], preferred_element_type=jnp.float32)
             + jnp.broadcast_to(bo_ref[...], (TB, Op)))
    o_act = jnp.where(o_pre > 0, o_pre, _SLOPE * o_pre)           # LeakyReLU(0.01)

    # Masked, numerically stable log-softmax over the first `valid_o` lanes.
    lane = lax.broadcasted_iota(jnp.int32, (TB, Op), 1)
    o_m = jnp.where(lane < valid_o, o_act, jnp.float32(-1e30))
    m = jnp.max(o_m, axis=1, keepdims=True)
    sh = o_m - m
    lse = jnp.log(jnp.sum(jnp.exp(sh), axis=1, keepdims=True))
    out_ref[...] = (sh - lse).astype(out_ref.dtype)               # single full-lane store


def rnn_sequence(xs, h0, w_i2h, b_i2h, w_i2o, b_i2o):
    """Run the RNN cell over a sequence inside ONE Pallas kernel.
       xs: (T, B, I), h0: (B, H), w_i2h: (I+H, H), b_i2h: (1, H),
       w_i2o: (I+H, O), b_i2o: (1, O)
       -> (log_probs (T, B, O), final_hidden (B, H))."""
    T, B, I = xs.shape
    H = w_i2h.shape[1]
    O = w_i2o.shape[1]

    Bp = _round_up(B, _SUBLANE)   # sublane padding
    Hp = _round_up(H, _LANE)      # hidden lane block
    Op = _round_up(O, _LANE)      # output lane block

    f32 = jnp.float32
    # Split fused (I+H, *) weights into input rows / hidden rows; zero-pad to lane blocks.
    wxh = jnp.pad(w_i2h[:I].astype(f32), ((0, 0), (0, Hp - H)))
    whh = jnp.pad(w_i2h[I:].astype(f32), ((0, Hp - H), (0, Hp - H)))
    bh = jnp.pad(b_i2h.astype(f32), ((0, 0), (0, Hp - H)))
    wxo = jnp.pad(w_i2o[:I].astype(f32), ((0, 0), (0, Op - O)))
    who = jnp.pad(w_i2o[I:].astype(f32), ((0, Hp - H), (0, Op - O)))
    bo = jnp.pad(b_i2o.astype(f32), ((0, 0), (0, Op - O)))

    xs_p = jnp.pad(xs.astype(f32), ((0, 0), (0, Bp - B), (0, 0))).reshape(T * Bp, I)
    h0_p = jnp.pad(h0.astype(f32), ((0, Bp - B), (0, Hp - H)))

    full = lambda a: pl.BlockSpec(a.shape, lambda: (0,) * a.ndim)

    out_shapes = (
        jax.ShapeDtypeStruct((T * Bp, Op), jnp.float32),   # log-probs (lane padded)
        jax.ShapeDtypeStruct((Bp, Hp), jnp.float32),       # final hidden (lane padded)
    )

    logp_flat, h_fin = pl.pallas_call(
        functools.partial(_rnn_seq_kernel, valid_o=O),
        out_shape=out_shapes,
        grid=(),  # tiny problem: whole sequence + weights resident in VMEM
        in_specs=[full(xs_p), full(h0_p), full(wxh), full(wxo),
                  full(whh), full(who), full(bh), full(bo)],
        out_specs=(pl.BlockSpec((T * Bp, Op), lambda: (0, 0)),
                   pl.BlockSpec((Bp, Hp), lambda: (0, 0))),
        scratch_shapes=[pltpu.VMEM((T * Bp, Hp), jnp.float32),   # xproj + bias
                        pltpu.VMEM((T * Bp, Hp), jnp.float32),   # all pre-step hiddens
                        pltpu.VMEM((Bp, Hp), jnp.float32)],      # running hidden
    )(xs_p, h0_p, wxh, wxo, whh, who, bh, bo)

    logp = logp_flat.reshape(T, Bp, Op)[:, :B, :O]
    return logp, h_fin[:B, :H]


def rnn_forward(x, h, w_i2h, b_i2h, w_i2o, b_i2o):
    """Single-step forward matching the PyTorch module's forward(input, hidden)."""
    logp, new_h = rnn_sequence(x[None], h, w_i2h, b_i2h, w_i2o, b_i2o)
    return logp[0], new_h


def init_params(key, input_size, hidden_size, output_size):
    """Deterministic init mimicking nn.Linear's uniform(-1/sqrt(fan_in), 1/sqrt(fan_in))."""
    fan_in = input_size + hidden_size
    bound = 1.0 / jnp.sqrt(fan_in)
    k1, k2, k3, k4 = jax.random.split(key, 4)
    w_i2h = jax.random.uniform(k1, (fan_in, hidden_size), jnp.float32, -bound, bound)
    b_i2h = jax.random.uniform(k2, (1, hidden_size), jnp.float32, -bound, bound)
    w_i2o = jax.random.uniform(k3, (fan_in, output_size), jnp.float32, -bound, bound)
    b_i2o = jax.random.uniform(k4, (1, output_size), jnp.float32, -bound, bound)
    return w_i2h, b_i2h, w_i2o, b_i2o


def _ref_step(x, h, w_i2h, b_i2h, w_i2o, b_i2o):
    combined = jnp.concatenate([x, h], axis=1)
    new_h = jax.nn.leaky_relu(combined @ w_i2h + b_i2h, _SLOPE)
    out = jax.nn.log_softmax(jax.nn.leaky_relu(combined @ w_i2o + b_i2o, _SLOPE), axis=1)
    return out, new_h


if __name__ == "__main__":
    key = jax.random.PRNGKey(0)
    kx, kp = jax.random.split(key, 2)

    batch = 2
    seq = 8
    input_size = 16
    hidden_size = 32
    output_size = 8

    xs = jax.random.normal(kx, (seq, batch, input_size), jnp.float32)
    h0 = jnp.zeros((batch, hidden_size), jnp.float32)  # initHidden()-style zeros
    w_i2h, b_i2h, w_i2o, b_i2o = init_params(kp, input_size, hidden_size, output_size)

    # Fused-sequence kernel (one pallas_call for all T steps).
    log_probs, h_final = jax.jit(rnn_sequence)(xs, h0, w_i2h, b_i2h, w_i2o, b_i2o)
    jax.block_until_ready((log_probs, h_final))

    # Single-step path (matches the module's forward signature exactly).
    step_out, step_h = jax.jit(rnn_forward)(xs[0], h0, w_i2h, b_i2h, w_i2o, b_i2o)
    jax.block_until_ready((step_out, step_h))

    # Pure-JAX reference: apply the module math step by step.
    h_ref = h0
    outs_ref = []
    for t in range(seq):
        o_t, h_ref = _ref_step(xs[t], h_ref, w_i2h, b_i2h, w_i2o, b_i2o)
        outs_ref.append(o_t)
    outs_ref = jnp.stack(outs_ref)

    assert jnp.allclose(log_probs, outs_ref, atol=1e-4, rtol=1e-4), "sequence output mismatch"
    assert jnp.allclose(h_final, h_ref, atol=1e-4, rtol=1e-4), "final hidden mismatch"
    assert jnp.allclose(step_out, outs_ref[0], atol=1e-4, rtol=1e-4), "single-step output mismatch"
    assert jnp.allclose(step_h, _ref_step(xs[0], h0, w_i2h, b_i2h, w_i2o, b_i2o)[1],
                        atol=1e-4, rtol=1e-4), "single-step hidden mismatch"

    print("KERNEL_OK")
</pallas_src>

<mosaic_0001>
module attributes {stable_mosaic.version = 11 : i64} {
  func.func @_rnn_seq_kernel(%arg0: memref<64x16xf32, #tpu.memory_space<vmem>>, %arg1: memref<8x128xf32, #tpu.memory_space<vmem>>, %arg2: memref<16x128xf32, #tpu.memory_space<vmem>>, %arg3: memref<16x128xf32, #tpu.memory_space<vmem>>, %arg4: memref<128x128xf32, #tpu.memory_space<vmem>>, %arg5: memref<128x128xf32, #tpu.memory_space<vmem>>, %arg6: memref<1x128xf32, #tpu.memory_space<vmem>>, %arg7: memref<1x128xf32, #tpu.memory_space<vmem>>, %arg8: memref<64x128xf32, #tpu.memory_space<vmem>>, %arg9: memref<8x128xf32, #tpu.memory_space<vmem>>, %arg10: memref<64x128xf32, #tpu.memory_space<vmem>>, %arg11: memref<64x128xf32, #tpu.memory_space<vmem>>, %arg12: memref<8x128xf32, #tpu.memory_space<vmem>>) attributes {dimension_semantics = [], scalar_prefetch = 0 : i64, scratch_operands = 3 : i64, tpu.core_type = #tpu.core_type<tc>} {
    %c0 = arith.constant 0 : index
    %c0_0 = arith.constant 0 : index
    %0 = vector.load %arg0[%c0, %c0_0] : memref<64x16xf32, #tpu.memory_space<vmem>>, vector<64x16xf32>
    %c0_1 = arith.constant 0 : index
    %c0_2 = arith.constant 0 : index
    %1 = vector.load %arg2[%c0_1, %c0_2] : memref<16x128xf32, #tpu.memory_space<vmem>>, vector<16x128xf32>
    %cst = arith.constant dense<0.000000e+00> : vector<64x128xf32>
    %2 = tpu.matmul %0, %1, %cst {dimension_numbers = #tpu.dot_dimension_numbers<[1], [0], [0], [1], [0, 0, 1, 1], [], []>} : vector<64x16xf32>, vector<16x128xf32>, vector<64x128xf32> -> vector<64x128xf32>
    %c0_3 = arith.constant 0 : index
    %c0_4 = arith.constant 0 : index
    %3 = vector.load %arg6[%c0_3, %c0_4] : memref<1x128xf32, #tpu.memory_space<vmem>>, vector<1x128xf32>
    %4 = vector.shape_cast %3 : vector<1x128xf32> to vector<1x128xf32>
    %5 = vector.broadcast %4 : vector<1x128xf32> to vector<64x128xf32>
    %6 = arith.addf %2, %5 : vector<64x128xf32>
    %c0_5 = arith.constant 0 : index
    %c0_6 = arith.constant 0 : index
    %7 = vector.load %arg10[%c0_5, %c0_6] : memref<64x128xf32, #tpu.memory_space<vmem>>, vector<64x128xf32>
    tpu.vector_store %arg10[%c0_5, %c0_6], %6 {strides = array<i32>} : memref<64x128xf32, #tpu.memory_space<vmem>>, vector<64x128xf32>,
    %c0_7 = arith.constant 0 : index
    %c0_8 = arith.constant 0 : index
    %8 = vector.load %arg4[%c0_7, %c0_8] : memref<128x128xf32, #tpu.memory_space<vmem>>, vector<128x128xf32>
    %c0_9 = arith.constant 0 : index
    %c0_10 = arith.constant 0 : index
    %9 = vector.load %arg1[%c0_9, %c0_10] : memref<8x128xf32, #tpu.memory_space<vmem>>, vector<8x128xf32>
    %c0_11 = arith.constant 0 : index
    %c0_12 = arith.constant 0 : index
    %10 = vector.load %arg12[%c0_11, %c0_12] : memref<8x128xf32, #tpu.memory_space<vmem>>, vector<8x128xf32>
    tpu.vector_store %arg12[%c0_11, %c0_12], %9 {strides = array<i32>} : memref<8x128xf32, #tpu.memory_space<vmem>>, vector<8x128xf32>,
    %c0_i32 = arith.constant 0 : i32
    %c8_i32 = arith.constant 8 : i32
    %11 = arith.muli %c0_i32, %c8_i32 : i32
    %12 = tpu.assume_multiple %11, 8 : i32
    %c0_13 = arith.constant 0 : index
    %c0_14 = arith.constant 0 : index
    %13 = vector.load %arg12[%c0_13, %c0_14] : memref<8x128xf32, #tpu.memory_space<vmem>>, vector<8x128xf32>
    %14 = arith.index_cast %12 : i32 to index
    %c0_15 = arith.constant 0 : index
    %15 = vector.load %arg11[%14, %c0_15] : memref<64x128xf32, #tpu.memory_space<vmem>>, vector<8x128xf32>
    tpu.vector_store %arg11[%14, %c0_15], %13 {strides = array<i32>} : memref<64x128xf32, #tpu.memory_space<vmem>>, vector<8x128xf32>,
    %cst_16 = arith.constant dense<0.000000e+00> : vector<8x128xf32>
    %16 = tpu.matmul %13, %8, %cst_16 {dimension_numbers = #tpu.dot_dimension_numbers<[1], [0], [0], [1], [0, 0, 1, 1], [], []>} : vector<8x128xf32>, vector<128x128xf32>, vector<8x128xf32> -> vector<8x128xf32>
    %17 = arith.index_cast %12 : i32 to index
    %c0_17 = arith.constant 0 : index
    %18 = vector.load %arg10[%17, %c0_17] : memref<64x128xf32, #tpu.memory_space<vmem>>, vector<8x128xf32>
    %19 = arith.addf %16, %18 : vector<8x128xf32>
    %cst_18 = arith.constant 0.000000e+00 : f32
    %20 = vector.broadcast %cst_18 : f32 to vector<8x128xf32>
    %21 = arith.cmpf ogt, %19, %20 : vector<8x128xf32>
    %cst_19 = arith.constant 0.00999999977 : f32
    %22 = vector.broadcast %cst_19 : f32 to vector<8x128xf32>
    %23 = arith.mulf %22, %19 : vector<8x128xf32>
    %24 = arith.select %21, %19, %23 : vector<8x128xi1>, vector<8x128xf32>
    %c0_20 = arith.constant 0 : index
    %c0_21 = arith.constant 0 : index
    %25 = vector.load %arg12[%c0_20, %c0_21] : memref<8x128xf32, #tpu.memory_space<vmem>>, vector<8x128xf32>
    tpu.vector_store %arg12[%c0_20, %c0_21], %24 {strides = array<i32>} : memref<8x128xf32, #tpu.memory_space<vmem>>, vector<8x128xf32>,
    %c1_i32 = arith.constant 1 : i32
    %c8_i32_22 = arith.constant 8 : i32
    %26 = arith.muli %c1_i32, %c8_i32_22 : i32
    %27 = tpu.assume_multiple %26, 8 : i32
    %c0_23 = arith.constant 0 : index
    %c0_24 = arith.constant 0 : index
    %28 = vector.load %arg12[%c0_23, %c0_24] : memref<8x128xf32, #tpu.memory_space<vmem>>, vector<8x128xf32>
    %29 = arith.index_cast %27 : i32 to index
    %c0_25 = arith.constant 0 : index
    %30 = vector.load %arg11[%29, %c0_25] : memref<64x128xf32, #tpu.memory_space<vmem>>, vector<8x128xf32>
    tpu.vector_store %arg11[%29, %c0_25], %28 {strides = array<i32>} : memref<64x128xf32, #tpu.memory_space<vmem>>, vector<8x128xf32>,
    %cst_26 = arith.constant dense<0.000000e+00> : vector<8x128xf32>
    %31 = tpu.matmul %28, %8, %cst_26 {dimension_numbers = #tpu.dot_dimension_numbers<[1], [0], [0], [1], [0, 0, 1, 1], [], []>} : vector<8x128xf32>, vector<128x128xf32>, vector<8x128xf32> -> vector<8x128xf32>
    %32 = arith.index_cast %27 : i32 to index
    %c0_27 = arith.constant 0 : index
    %33 = vector.load %arg10[%32, %c0_27] : memref<64x128xf32, #tpu.memory_space<vmem>>, vector<8x128xf32>
    %34 = arith.addf %31, %33 : vector<8x128xf32>
    %cst_28 = arith.constant 0.000000e+00 : f32
    %35 = vector.broadcast %cst_28 : f32 to vector<8x128xf32>
    %36 = arith.cmpf ogt, %34, %35 : vector<8x128xf32>
    %cst_29 = arith.constant 0.00999999977 : f32
    %37 = vector.broadcast %cst_29 : f32 to vector<8x128xf32>
    %38 = arith.mulf %37, %34 : vector<8x128xf32>
    %39 = arith.select %36, %34, %38 : vector<8x128xi1>, vector<8x128xf32>
    %c0_30 = arith.constant 0 : index
    %c0_31 = arith.constant 0 : index
    %40 = vector.load %arg12[%c0_30, %c0_31] : memref<8x128xf32, #tpu.memory_space<vmem>>, vector<8x128xf32>
    tpu.vector_store %arg12[%c0_30, %c0_31], %39 {strides = array<i32>} : memref<8x128xf32, #tpu.memory_space<vmem>>, vector<8x128xf32>,
    %c2_i32 = arith.constant 2 : i32
    %c8_i32_32 = arith.constant 8 : i32
    %41 = arith.muli %c2_i32, %c8_i32_32 : i32
    %42 = tpu.assume_multiple %41, 8 : i32
    %c0_33 = arith.constant 0 : index
    %c0_34 = arith.constant 0 : index
    %43 = vector.load %arg12[%c0_33, %c0_34] : memref<8x128xf32, #tpu.memory_space<vmem>>, vector<8x128xf32>
    %44 = arith.index_cast %42 : i32 to index
    %c0_35 = arith.constant 0 : index
    %45 = vector.load %arg11[%44, %c0_35] : memref<64x128xf32, #tpu.memory_space<vmem>>, vector<8x128xf32>
    tpu.vector_store %arg11[%44, %c0_35], %43 {strides = array<i32>} : memref<64x128xf32, #tpu.memory_space<vmem>>, vector<8x128xf32>,
    %cst_36 = arith.constant dense<0.000000e+00> : vector<8x128xf32>
    %46 = tpu.matmul %43, %8, %cst_36 {dimension_numbers = #tpu.dot_dimension_numbers<[1], [0], [0], [1], [0, 0, 1, 1], [], []>} : vector<8x128xf32>, vector<128x128xf32>, vector<8x128xf32> -> vector<8x128xf32>
    %47 = arith.index_cast %42 : i32 to index
    %c0_37 = arith.constant 0 : index
    %48 = vector.load %arg10[%47, %c0_37] : memref<64x128xf32, #tpu.memory_space<vmem>>, vector<8x128xf32>
    %49 = arith.addf %46, %48 : vector<8x128xf32>
    %cst_38 = arith.constant 0.000000e+00 : f32
    %50 = vector.broadcast %cst_38 : f32 to vector<8x128xf32>
    %51 = arith.cmpf ogt, %49, %50 : vector<8x128xf32>
    %cst_39 = arith.constant 0.00999999977 : f32
    %52 = vector.broadcast %cst_39 : f32 to vector<8x128xf32>
    %53 = arith.mulf %52, %49 : vector<8x128xf32>
    %54 = arith.select %51, %49, %53 : vector<8x128xi1>, vector<8x128xf32>
    %c0_40 = arith.constant 0 : index
    %c0_41 = arith.constant 0 : index
    %55 = vector.load %arg12[%c0_40, %c0_41] : memref<8x128xf32, #tpu.memory_space<vmem>>, vector<8x128xf32>
    tpu.vector_store %arg12[%c0_40, %c0_41], %54 {strides = array<i32>} : memref<8x128xf32, #tpu.memory_space<vmem>>, vector<8x128xf32>,
    %c3_i32 = arith.constant 3 : i32
    %c8_i32_42 = arith.constant 8 : i32
    %56 = arith.muli %c3_i32, %c8_i32_42 : i32
    %57 = tpu.assume_multiple %56, 8 : i32
    %c0_43 = arith.constant 0 : index
    %c0_44 = arith.constant 0 : index
    %58 = vector.load %arg12[%c0_43, %c0_44] : memref<8x128xf32, #tpu.memory_space<vmem>>, vector<8x128xf32>
    %59 = arith.index_cast %57 : i32 to index
    %c0_45 = arith.constant 0 : index
    %60 = vector.load %arg11[%59, %c0_45] : memref<64x128xf32, #tpu.memory_space<vmem>>, vector<8x128xf32>
    tpu.vector_store %arg11[%59, %c0_45], %58 {strides = array<i32>} : memref<64x128xf32, #tpu.memory_space<vmem>>, vector<8x128xf32>,
    %cst_46 = arith.constant dense<0.000000e+00> : vector<8x128xf32>
    %61 = tpu.matmul %58, %8, %cst_46 {dimension_numbers = #tpu.dot_dimension_numbers<[1], [0], [0], [1], [0, 0, 1, 1], [], []>} : vector<8x128xf32>, vector<128x128xf32>, vector<8x128xf32> -> vector<8x128xf32>
    %62 = arith.index_cast %57 : i32 to index
    %c0_47 = arith.constant 0 : index
    %63 = vector.load %arg10[%62, %c0_47] : memref<64x128xf32, #tpu.memory_space<vmem>>, vector<8x128xf32>
    %64 = arith.addf %61, %63 : vector<8x128xf32>
    %cst_48 = arith.constant 0.000000e+00 : f32
    %65 = vector.broadcast %cst_48 : f32 to vector<8x128xf32>
    %66 = arith.cmpf ogt, %64, %65 : vector<8x128xf32>
    %cst_49 = arith.constant 0.00999999977 : f32
    %67 = vector.broadcast %cst_49 : f32 to vector<8x128xf32>
    %68 = arith.mulf %67, %64 : vector<8x128xf32>
    %69 = arith.select %66, %64, %68 : vector<8x128xi1>, vector<8x128xf32>
    %c0_50 = arith.constant 0 : index
    %c0_51 = arith.constant 0 : index
    %70 = vector.load %arg12[%c0_50, %c0_51] : memref<8x128xf32, #tpu.memory_space<vmem>>, vector<8x128xf32>
    tpu.vector_store %arg12[%c0_50, %c0_51], %69 {strides = array<i32>} : memref<8x128xf32, #tpu.memory_space<vmem>>, vector<8x128xf32>,
    %c4_i32 = arith.constant 4 : i32
    %c8_i32_52 = arith.constant 8 : i32
    %71 = arith.muli %c4_i32, %c8_i32_52 : i32
    %72 = tpu.assume_multiple %71, 8 : i32
    %c0_53 = arith.constant 0 : index
    %c0_54 = arith.constant 0 : index
    %73 = vector.load %arg12[%c0_53, %c0_54] : memref<8x128xf32, #tpu.memory_space<vmem>>, vector<8x128xf32>
    %74 = arith.index_cast %72 : i32 to index
    %c0_55 = arith.constant 0 : index
    %75 = vector.load %arg11[%74, %c0_55] : memref<64x128xf32, #tpu.memory_space<vmem>>, vector<8x128xf32>
    tpu.vector_store %arg11[%74, %c0_55], %73 {strides = array<i32>} : memref<64x128xf32, #tpu.memory_space<vmem>>, vector<8x128xf32>,
    %cst_56 = arith.constant dense<0.000000e+00> : vector<8x128xf32>
    %76 = tpu.matmul %73, %8, %cst_56 {dimension_numbers = #tpu.dot_dimension_numbers<[1], [0], [0], [1], [0, 0, 1, 1], [], []>} : vector<8x128xf32>, vector<128x128xf32>, vector<8x128xf32> -> vector<8x128xf32>
    %77 = arith.index_cast %72 : i32 to index
    %c0_57 = arith.constant 0 : index
    %78 = vector.load %arg10[%77, %c0_57] : memref<64x128xf32, #tpu.memory_space<vmem>>, vector<8x128xf32>
    %79 = arith.addf %76, %78 : vector<8x128xf32>
    %cst_58 = arith.constant 0.000000e+00 : f32
    %80 = vector.broadcast %cst_58 : f32 to vector<8x128xf32>
    %81 = arith.cmpf ogt, %79, %80 : vector<8x128xf32>
    %cst_59 = arith.constant 0.00999999977 : f32
    %82 = vector.broadcast %cst_59 : f32 to vector<8x128xf32>
    %83 = arith.mulf %82, %79 : vector<8x128xf32>
    %84 = arith.select %81, %79, %83 : vector<8x128xi1>, vector<8x128xf32>
    %c0_60 = arith.constant 0 : index
    %c0_61 = arith.constant 0 : index
    %85 = vector.load %arg12[%c0_60, %c0_61] : memref<8x128xf32, #tpu.memory_space<vmem>>, vector<8x128xf32>
    tpu.vector_store %arg12[%c0_60, %c0_61], %84 {strides = array<i32>} : memref<8x128xf32, #tpu.memory_space<vmem>>, vector<8x128xf32>,
    %c5_i32 = arith.constant 5 : i32
    %c8_i32_62 = arith.constant 8 : i32
    %86 = arith.muli %c5_i32, %c8_i32_62 : i32
    %87 = tpu.assume_multiple %86, 8 : i32
    %c0_63 = arith.constant 0 : index
    %c0_64 = arith.constant 0 : index
    %88 = vector.load %arg12[%c0_63, %c0_64] : memref<8x128xf32, #tpu.memory_space<vmem>>, vector<8x128xf32>
    %89 = arith.index_cast %87 : i32 to index
    %c0_65 = arith.constant 0 : index
    %90 = vector.load %arg11[%89, %c0_65] : memref<64x128xf32, #tpu.memory_space<vmem>>, vector<8x128xf32>
    tpu.vector_store %arg11[%89, %c0_65], %88 {strides = array<i32>} : memref<64x128xf32, #tpu.memory_space<vmem>>, vector<8x128xf32>,
    %cst_66 = arith.constant dense<0.000000e+00> : vector<8x128xf32>
    %91 = tpu.matmul %88, %8, %cst_66 {dimension_numbers = #tpu.dot_dimension_numbers<[1], [0], [0], [1], [0, 0, 1, 1], [], []>} : vector<8x128xf32>, vector<128x128xf32>, vector<8x128xf32> -> vector<8x128xf32>
    %92 = arith.index_cast %87 : i32 to index
    %c0_67 = arith.constant 0 : index
    %93 = vector.load %arg10[%92, %c0_67] : memref<64x128xf32, #tpu.memory_space<vmem>>, vector<8x128xf32>
    %94 = arith.addf %91, %93 : vector<8x128xf32>
    %cst_68 = arith.constant 0.000000e+00 : f32
    %95 = vector.broadcast %cst_68 : f32 to vector<8x128xf32>
    %96 = arith.cmpf ogt, %94, %95 : vector<8x128xf32>
    %cst_69 = arith.constant 0.00999999977 : f32
    %97 = vector.broadcast %cst_69 : f32 to vector<8x128xf32>
    %98 = arith.mulf %97, %94 : vector<8x128xf32>
    %99 = arith.select %96, %94, %98 : vector<8x128xi1>, vector<8x128xf32>
    %c0_70 = arith.constant 0 : index
    %c0_71 = arith.constant 0 : index
    %100 = vector.load %arg12[%c0_70, %c0_71] : memref<8x128xf32, #tpu.memory_space<vmem>>, vector<8x128xf32>
    tpu.vector_store %arg12[%c0_70, %c0_71], %99 {strides = array<i32>} : memref<8x128xf32, #tpu.memory_space<vmem>>, vector<8x128xf32>,
    %c6_i32 = arith.constant 6 : i32
    %c8_i32_72 = arith.constant 8 : i32
    %101 = arith.muli %c6_i32, %c8_i32_72 : i32
    %102 = tpu.assume_multiple %101, 8 : i32
    %c0_73 = arith.constant 0 : index
    %c0_74 = arith.constant 0 : index
    %103 = vector.load %arg12[%c0_73, %c0_74] : memref<8x128xf32, #tpu.memory_space<vmem>>, vector<8x128xf32>
    %104 = arith.index_cast %102 : i32 to index
    %c0_75 = arith.constant 0 : index
    %105 = vector.load %arg11[%104, %c0_75] : memref<64x128xf32, #tpu.memory_space<vmem>>, vector<8x128xf32>
    tpu.vector_store %arg11[%104, %c0_75], %103 {strides = array<i32>} : memref<64x128xf32, #tpu.memory_space<vmem>>, vector<8x128xf32>,
    %cst_76 = arith.constant dense<0.000000e+00> : vector<8x128xf32>
    %106 = tpu.matmul %103, %8, %cst_76 {dimension_numbers = #tpu.dot_dimension_numbers<[1], [0], [0], [1], [0, 0, 1, 1], [], []>} : vector<8x128xf32>, vector<128x128xf32>, vector<8x128xf32> -> vector<8x128xf32>
    %107 = arith.index_cast %102 : i32 to index
    %c0_77 = arith.constant 0 : index
    %108 = vector.load %arg10[%107, %c0_77] : memref<64x128xf32, #tpu.memory_space<vmem>>, vector<8x128xf32>
    %109 = arith.addf %106, %108 : vector<8x128xf32>
    %cst_78 = arith.constant 0.000000e+00 : f32
    %110 = vector.broadcast %cst_78 : f32 to vector<8x128xf32>
    %111 = arith.cmpf ogt, %109, %110 : vector<8x128xf32>
    %cst_79 = arith.constant 0.00999999977 : f32
    %112 = vector.broadcast %cst_79 : f32 to vector<8x128xf32>
    %113 = arith.mulf %112, %109 : vector<8x128xf32>
    %114 = arith.select %111, %109, %113 : vector<8x128xi1>, vector<8x128xf32>
    %c0_80 = arith.constant 0 : index
    %c0_81 = arith.constant 0 : index
    %115 = vector.load %arg12[%c0_80, %c0_81] : memref<8x128xf32, #tpu.memory_space<vmem>>, vector<8x128xf32>
    tpu.vector_store %arg12[%c0_80, %c0_81], %114 {strides = array<i32>} : memref<8x128xf32, #tpu.memory_space<vmem>>, vector<8x128xf32>,
    %c7_i32 = arith.constant 7 : i32
    %c8_i32_82 = arith.constant 8 : i32
    %116 = arith.muli %c7_i32, %c8_i32_82 : i32
    %117 = tpu.assume_multiple %116, 8 : i32
    %c0_83 = arith.constant 0 : index
    %c0_84 = arith.constant 0 : index
    %118 = vector.load %arg12[%c0_83, %c0_84] : memref<8x128xf32, #tpu.memory_space<vmem>>, vector<8x128xf32>
    %119 = arith.index_cast %117 : i32 to index
    %c0_85 = arith.constant 0 : index
    %120 = vector.load %arg11[%119, %c0_85] : memref<64x128xf32, #tpu.memory_space<vmem>>, vector<8x128xf32>
    tpu.vector_store %arg11[%119, %c0_85], %118 {strides = array<i32>} : memref<64x128xf32, #tpu.memory_space<vmem>>, vector<8x128xf32>,
    %cst_86 = arith.constant dense<0.000000e+00> : vector<8x128xf32>
    %121 = tpu.matmul %118, %8, %cst_86 {dimension_numbers = #tpu.dot_dimension_numbers<[1], [0], [0], [1], [0, 0, 1, 1], [], []>} : vector<8x128xf32>, vector<128x128xf32>, vector<8x128xf32> -> vector<8x128xf32>
    %122 = arith.index_cast %117 : i32 to index
    %c0_87 = arith.constant 0 : index
    %123 = vector.load %arg10[%122, %c0_87] : memref<64x128xf32, #tpu.memory_space<vmem>>, vector<8x128xf32>
    %124 = arith.addf %121, %123 : vector<8x128xf32>
    %cst_88 = arith.constant 0.000000e+00 : f32
    %125 = vector.broadcast %cst_88 : f32 to vector<8x128xf32>
    %126 = arith.cmpf ogt, %124, %125 : vector<8x128xf32>
    %cst_89 = arith.constant 0.00999999977 : f32
    %127 = vector.broadcast %cst_89 : f32 to vector<8x128xf32>
    %128 = arith.mulf %127, %124 : vector<8x128xf32>
    %129 = arith.select %126, %124, %128 : vector<8x128xi1>, vector<8x128xf32>
    %c0_90 = arith.constant 0 : index
    %c0_91 = arith.constant 0 : index
    %130 = vector.load %arg12[%c0_90, %c0_91] : memref<8x128xf32, #tpu.memory_space<vmem>>, vector<8x128xf32>
    tpu.vector_store %arg12[%c0_90, %c0_91], %129 {strides = array<i32>} : memref<8x128xf32, #tpu.memory_space<vmem>>, vector<8x128xf32>,
    %c8_i32_92 = arith.constant 8 : i32
    %c0_93 = arith.constant 0 : index
    %c0_94 = arith.constant 0 : index
    %131 = vector.load %arg12[%c0_93, %c0_94] : memref<8x128xf32, #tpu.memory_space<vmem>>, vector<8x128xf32>
    %c0_95 = arith.constant 0 : index
    %c0_96 = arith.constant 0 : index
    %132 = vector.load %arg9[%c0_95, %c0_96] : memref<8x128xf32, #tpu.memory_space<vmem>>, vector<8x128xf32>
    tpu.vector_store %arg9[%c0_95, %c0_96], %131 {strides = array<i32>} : memref<8x128xf32, #tpu.memory_space<vmem>>, vector<8x128xf32>,
    %c0_97 = arith.constant 0 : index
    %c0_98 = arith.constant 0 : index
    %133 = vector.load %arg11[%c0_97, %c0_98] : memref<64x128xf32, #tpu.memory_space<vmem>>, vector<64x128xf32>
    %c0_99 = arith.constant 0 : index
    %c0_100 = arith.constant 0 : index
    %134 = vector.load %arg0[%c0_99, %c0_100] : memref<64x16xf32, #tpu.memory_space<vmem>>, vector<64x16xf32>
    %c0_101 = arith.constant 0 : index
    %c0_102 = arith.constant 0 : index
    %135 = vector.load %arg3[%c0_101, %c0_102] : memref<16x128xf32, #tpu.memory_space<vmem>>, vector<16x128xf32>
    %cst_103 = arith.constant dense<0.000000e+00> : vector<64x128xf32>
    %136 = tpu.matmul %134, %135, %cst_103 {dimension_numbers = #tpu.dot_dimension_numbers<[1], [0], [0], [1], [0, 0, 1, 1], [], []>} : vector<64x16xf32>, vector<16x128xf32>, vector<64x128xf32> -> vector<64x128xf32>
    %c0_104 = arith.constant 0 : index
    %c0_105 = arith.constant 0 : index
    %137 = vector.load %arg5[%c0_104, %c0_105] : memref<128x128xf32, #tpu.memory_space<vmem>>, vector<128x128xf32>
    %cst_106 = arith.constant dense<0.000000e+00> : vector<64x128xf32>
    %138 = tpu.matmul %133, %137, %cst_106 {dimension_numbers = #tpu.dot_dimension_numbers<[1], [0], [0], [1], [0, 0, 1, 1], [], []>} : vector<64x128xf32>, vector<128x128xf32>, vector<64x128xf32> -> vector<64x128xf32>
    %139 = arith.addf %136, %138 : vector<64x128xf32>
    %c0_107 = arith.constant 0 : index
    %c0_108 = arith.constant 0 : index
    %140 = vector.load %arg7[%c0_107, %c0_108] : memref<1x128xf32, #tpu.memory_space<vmem>>, vector<1x128xf32>
    %141 = vector.shape_cast %140 : vector<1x128xf32> to vector<1x128xf32>
    %142 = vector.broadcast %141 : vector<1x128xf32> to vector<64x128xf32>
    %143 = arith.addf %139, %142 : vector<64x128xf32>
    %cst_109 = arith.constant 0.000000e+00 : f32
    %144 = vector.broadcast %cst_109 : f32 to vector<64x128xf32>
    %145 = arith.cmpf ogt, %143, %144 : vector<64x128xf32>
    %cst_110 = arith.constant 0.00999999977 : f32
    %146 = vector.broadcast %cst_110 : f32 to vector<64x128xf32>
    %147 = arith.mulf %146, %143 : vector<64x128xf32>
    %148 = arith.select %145, %143, %147 : vector<64x128xi1>, vector<64x128xf32>
    %149 = tpu.iota {dimensions = array<i32: 1>} : vector<64x128xi32>
    %c8_i32_111 = arith.constant 8 : i32
    %150 = vector.broadcast %c8_i32_111 : i32 to vector<64x128xi32>
    %151 = arith.cmpi slt, %149, %150 : vector<64x128xi32>
    %cst_112 = arith.constant -1.000000e+30 : f32
    %152 = vector.broadcast %cst_112 : f32 to vector<64x128xf32>
    %153 = arith.select %151, %148, %152 : vector<64x128xi1>, vector<64x128xf32>
    %cst_113 = arith.constant dense<0xFF800000> : vector<64xf32>
    %154 = vector.multi_reduction <maximumf>, %153, %cst_113 [1] : vector<64x128xf32> to vector<64xf32>
    %155 = vector.shape_cast %154 : vector<64xf32> to vector<64x1xf32>
    %156 = vector.broadcast %155 : vector<64x1xf32> to vector<64x128xf32>
    %157 = arith.subf %153, %156 : vector<64x128xf32>
    %158 = math.exp %157 : vector<64x128xf32>
    %cst_114 = arith.constant dense<0.000000e+00> : vector<64xf32>
    %159 = vector.multi_reduction <add>, %158, %cst_114 [1] : vector<64x128xf32> to vector<64xf32>
    %160 = vector.shape_cast %159 : vector<64xf32> to vector<64x1xf32>
    %161 = math.log %160 : vector<64x1xf32>
    %162 = vector.broadcast %161 : vector<64x1xf32> to vector<64x128xf32>
    %163 = arith.subf %157, %162 : vector<64x128xf32>
    %c0_115 = arith.constant 0 : index
    %c0_116 = arith.constant 0 : index
    %164 = vector.load %arg8[%c0_115, %c0_116] : memref<64x128xf32, #tpu.memory_space<vmem>>, vector<64x128xf32>
    tpu.vector_store %arg8[%c0_115, %c0_116], %163 {strides = array<i32>} : memref<64x128xf32, #tpu.memory_space<vmem>>, vector<64x128xf32>,
    return
  }
}

</mosaic_0001>

<llo_original>
// kernel: rnn_sequence.1
$region0: #{rnn_sequence.1}
  #allocation0 [shape = 'u32[]', space=smem, size = 0x4, offset = 0x4, fixed_abs, tag = 'smem constant byte address 0x4 - core index']
  #allocation1 [shape = 'u32[144,128]{1,0:T(1,128)}', space=vmem, size = 0x12000, scoped, tag = 'internal scratch']
  #allocation2 [shape = 'f32[64,128]{1,0:T(8,128)}', space=vmem, size = 0x8000, scoped, tag = 'scratch operand']
  #allocation3 [shape = 'f32[64,128]{1,0:T(8,128)}', space=vmem, size = 0x8000, scoped, tag = 'scratch operand']
  #allocation4 [shape = 'f32[8,128]{1,0:T(8,128)}', space=vmem, size = 0x1000, scoped, tag = 'scratch operand']
  %s0 = inlined_call_operand.vmem [shape: f32[64,16], index: 0, kind: input, shape index: {}]
  %s1 = inlined_call_operand.vmem [shape: f32[8,128], index: 1, kind: input, shape index: {}]
  %s2 = inlined_call_operand.vmem [shape: f32[16,128], index: 2, kind: input, shape index: {}]
  %s3 = inlined_call_operand.vmem [shape: f32[16,128], index: 3, kind: input, shape index: {}]
  %s4 = inlined_call_operand.vmem [shape: f32[128,128], index: 4, kind: input, shape index: {}]
  %s5 = inlined_call_operand.vmem [shape: f32[128,128], index: 5, kind: input, shape index: {}]
  %s6 = inlined_call_operand.vmem [shape: f32[1,128], index: 6, kind: input, shape index: {}]
  %s7 = inlined_call_operand.vmem [shape: f32[1,128], index: 7, kind: input, shape index: {}]
  %s8 = inlined_call_operand.vmem [shape: f32[64,128], index: 8, kind: output, shape index: {0}]
  %s9 = inlined_call_operand.vmem [shape: f32[8,128], index: 9, kind: output, shape index: {1}]
  %10 = xla_tuple %s8, %s9
  %s11 = sld [smem:[#allocation0]]
  $region50: #{rnn_sequence.1} parent=0
    _
  %s13 = ssub.s32 1, %s11
  %s14 = scalar_select 0, %s13, %s11
  // Predicated region
  $region2: #{rnn_sequence.1} parent=0 // pred_check
    _
  $region3: #{rnn_sequence.1} parent=0 // pred_check_branch
    %16 = sbr.rel (0) target = $region5
  $region4: #{rnn_sequence.1} parent=0 // pred_region
    _
  $region5: #{rnn_sequence.1} parent=0 // pred_fallthru
    _
  // Predicated region
  $region6: #{rnn_sequence.1} parent=0 // pred_check
    _
  $region7: #{rnn_sequence.1} parent=0 // pred_check_branch
    %18 = sbr.rel (0) target = $region9
  $region8: #{rnn_sequence.1} parent=0 // pred_region
    _
  $region9: #{rnn_sequence.1} parent=0 // pred_fallthru
    _
  // Predicated region
  $region10: #{rnn_sequence.1} parent=0 // pred_check
    _
  $region11: #{rnn_sequence.1} parent=0 // pred_check_branch
    %20 = sbr.rel (0) target = $region13
  $region12: #{rnn_sequence.1} parent=0 // pred_region
    _
  $region13: #{rnn_sequence.1} parent=0 // pred_fallthru
    _
  // Predicated region
  $region14: #{rnn_sequence.1} parent=0 // pred_check
    _
  $region15: #{rnn_sequence.1} parent=0 // pred_check_branch
    %22 = sbr.rel (0) target = $region17
  $region16: #{rnn_sequence.1} parent=0 // pred_region
    _
  $region17: #{rnn_sequence.1} parent=0 // pred_fallthru
    _
  // Predicated region
  $region18: #{rnn_sequence.1} parent=0 // pred_check
    _
  $region19: #{rnn_sequence.1} parent=0 // pred_check_branch
    %24 = sbr.rel (0) target = $region21
  $region20: #{rnn_sequence.1} parent=0 // pred_region
    _
  $region21: #{rnn_sequence.1} parent=0 // pred_fallthru
    _
  // Predicated region
  $region22: #{rnn_sequence.1} parent=0 // pred_check
    _
  $region23: #{rnn_sequence.1} parent=0 // pred_check_branch
    %26 = sbr.rel (0) target = $region25
  $region24: #{rnn_sequence.1} parent=0 // pred_region
    _
  $region25: #{rnn_sequence.1} parent=0 // pred_fallthru
    _
  // Predicated region
  $region26: #{rnn_sequence.1} parent=0 // pred_check
    _
  $region27: #{rnn_sequence.1} parent=0 // pred_check_branch
    %28 = sbr.rel (0) target = $region29
  $region28: #{rnn_sequence.1} parent=0 // pred_region
    _
  $region29: #{rnn_sequence.1} parent=0 // pred_fallthru
    _
  // Predicated region
  $region30: #{rnn_sequence.1} parent=0 // pred_check
    _
  $region31: #{rnn_sequence.1} parent=0 // pred_check_branch
    %30 = sbr.rel (0) target = $region33
  $region32: #{rnn_sequence.1} parent=0 // pred_region
    _
  $region33: #{rnn_sequence.1} parent=0 // pred_fallthru
    _
  %v31 = vld [vmem:[%s0] sm:$0xff]
  %v32 = vld [vmem:[%s0 + $0x8] sm:$0xff]
  %v33 = vld [vmem:[%s0 + $0x10] sm:$0xff]
  %v34 = vld [vmem:[%s0 + $0x18] sm:$0xff]
  %v35 = vld [vmem:[%s0 + $0x20] sm:$0xff]
  %v36 = vld [vmem:[%s0 + $0x28] sm:$0xff]
  %v37 = vld [vmem:[%s0 + $0x30] sm:$0xff]
  %v38 = vld [vmem:[%s0 + $0x38] sm:$0xff]
  %v39 = vld [vmem:[%s2] sm:$0xff]
  %v40 = vld [vmem:[%s2 + $0x8] sm:$0xff]
  %v41 = vld [vmem:[%s6] sm:$0x1]
  %v43 = vlaneseq
  %v44 = vshrl.u32 %v43, 7
  %v45 = vsub.s32 0, %v44
  %v46 = vrot.slane %v41, %v45
  %vm48 = vcmask 130048
  %v50 = vsel %vm48, %v31, 0
  %v53 = vsel %vm48, %v32, 0
  %v56 = vsel %vm48, %v33, 0
  %v59 = vsel %vm48, %v34, 0
  %v62 = vsel %vm48, %v35, 0
  %v65 = vsel %vm48, %v36, 0
  %v68 = vsel %vm48, %v37, 0
  %v71 = vsel %vm48, %v38, 0
  %73 = vmatprep.subr.mxu0 0.0
  %74 = vmatpush1.msra.mxu0 0.0
  %75 = vmatprep.subr.mxu0 0.0
  %76 = vmatpush1.msra.mxu0 0.0
  %77 = vmatprep.subr.mxu0 0.0
  %78 = vmatpush1.msra.mxu0 0.0
  %79 = vmatprep.subr.mxu0 0.0
  %80 = vmatpush1.msra.mxu0 0.0
  %81 = vmatprep.subr.mxu0 0.0
  %82 = vmatpush1.msra.mxu0 0.0
  %83 = vmatprep.subr.mxu0 0.0
  %84 = vmatpush1.msra.mxu0 0.0
  %85 = vmatprep.subr.mxu0 0.0
  %86 = vmatpush1.msra.mxu0 0.0
  %87 = vmatprep.subr.mxu0 0.0
  %88 = vmatpush1.msra.mxu0 0.0
  %89 = vmatprep.subr.mxu0 0.0
  %90 = vmatpush1.msra.mxu0 0.0
  %91 = vmatprep.subr.mxu0 0.0
  %92 = vmatpush1.msra.mxu0 0.0
  %93 = vmatprep.subr.mxu0 0.0
  %94 = vmatpush1.msra.mxu0 0.0
  %95 = vmatprep.subr.mxu0 0.0
  %96 = vmatpush1.msra.mxu0 0.0
  %97 = vmatprep.subr.mxu0 0.0
  %98 = vmatpush1.msra.mxu0 0.0
  %99 = vmatprep.subr.mxu0 0.0
  %100 = vmatpush1.msra.mxu0 0.0
  %101 = vmatprep.subr.mxu0 0.0
  %102 = vmatpush1.msra.mxu0 %v40
  %103 = vmatprep.subr.mxu0 0.0
  %104 = vmatpush1.msra.mxu0 %v39
  %105 = vmatprep.subr.mxu0 0.0
  %106 = vmatpush2.msra.mxu0 0.0
  %107 = vmatprep.subr.mxu0 0.0
  %108 = vmatpush2.msra.mxu0 0.0
  %109 = vmatprep.subr.mxu0 0.0
  %110 = vmatpush2.msra.mxu0 0.0
  %111 = vmatprep.subr.mxu0 0.0
  %112 = vmatpush2.msra.mxu0 0.0
  %113 = vmatprep.subr.mxu0 0.0
  %114 = vmatpush2.msra.mxu0 0.0
  %115 = vmatprep.subr.mxu0 0.0
  %116 = vmatpush2.msra.mxu0 0.0
  %117 = vmatprep.subr.mxu0 0.0
  %118 = vmatpush2.msra.mxu0 0.0
  %119 = vmatprep.subr.mxu0 0.0
  %120 = vmatpush2.msra.mxu0 0.0
  %121 = vmatprep.subr.mxu0 0.0
  %122 = vmatpush2.msra.mxu0 0.0
  %123 = vmatprep.subr.mxu0 0.0
  %124 = vmatpush2.msra.mxu0 0.0
  %125 = vmatprep.subr.mxu0 0.0
  %126 = vmatpush2.msra.mxu0 0.0
  %127 = vmatprep.subr.mxu0 0.0
  %128 = vmatpush2.msra.mxu0 0.0
  %129 = vmatprep.subr.mxu0 0.0
  %130 = vmatpush2.msra.mxu0 0.0
  %131 = vmatprep.subr.mxu0 0.0
  %132 = vmatpush2.msra.mxu0 0.0
  %133 = vmatprep.subr.mxu0 0.0
  %134 = vmatpush2.msra.mxu0 0.0
  %135 = vmatprep.subr.mxu0 0.0
  %136 = vmatpush2.msra.mxu0 0.0
  %137 = vmatprep.mubr.f32.mxu0 0.0
  %138 = vmatmul.mubr.f32.gmra.mxu0 %v50
  %v139 = vpop.f32.mrf.mxu0
  %v140 = vadd.f32 %v46, %v139
  %v141 = vpop.f32.mrf.mxu0
  %142 = vmatprep.mubr.f32.mxu0 0.0
  %143 = vmatmul.mubr.f32.gmra.mxu0 %v53
  %v144 = vpop.f32.mrf.mxu0
  %v145 = vadd.f32 %v46, %v144
  %v146 = vpop.f32.mrf.mxu0
  %147 = vmatprep.mubr.f32.mxu0 0.0
  %148 = vmatmul.mubr.f32.gmra.mxu0 %v56
  %v149 = vpop.f32.mrf.mxu0
  %v150 = vadd.f32 %v46, %v149
  %v151 = vpop.f32.mrf.mxu0
  %152 = vmatprep.mubr.f32.mxu0 0.0
  %153 = vmatmul.mubr.f32.gmra.mxu0 %v59
  %v154 = vpop.f32.mrf.mxu0
  %v155 = vadd.f32 %v46, %v154
  %v156 = vpop.f32.mrf.mxu0
  %157 = vmatprep.mubr.f32.mxu0 0.0
  %158 = vmatmul.mubr.f32.gmra.mxu0 %v62
  %v159 = vpop.f32.mrf.mxu0
  %v160 = vadd.f32 %v46, %v159
  %v161 = vpop.f32.mrf.mxu0
  %162 = vmatprep.mubr.f32.mxu0 0.0
  %163 = vmatmul.mubr.f32.gmra.mxu0 %v65
  %v164 = vpop.f32.mrf.mxu0
  %v165 = vadd.f32 %v46, %v164
  %v166 = vpop.f32.mrf.mxu0
  %167 = vmatprep.mubr.f32.mxu0 0.0
  %168 = vmatmul.mubr.f32.gmra.mxu0 %v68
  %v169 = vpop.f32.mrf.mxu0
  %v170 = vadd.f32 %v46, %v169
  %v171 = vpop.f32.mrf.mxu0
  %172 = vmatprep.mubr.f32.mxu0 0.0
  %173 = vmatmul.mubr.f32.gmra.mxu0 %v71
  %v174 = vpop.f32.mrf.mxu0
  %v175 = vadd.f32 %v46, %v174
  %v176 = vpop.f32.mrf.mxu0
  %177 = vdwg.mxu0
  %178 = vst [vmem:[#allocation2] sm:$0xff] %v140
  %179 = vst [vmem:[#allocation2 + $0x8] sm:$0xff] %v145
  %180 = vst [vmem:[#allocation2 + $0x10] sm:$0xff] %v150
  %181 = vst [vmem:[#allocation2 + $0x18] sm:$0xff] %v155
  %182 = vst [vmem:[#allocation2 + $0x20] sm:$0xff] %v160
  %183 = vst [vmem:[#allocation2 + $0x28] sm:$0xff] %v165
  %184 = vst [vmem:[#allocation2 + $0x30] sm:$0xff] %v170
  %185 = vst [vmem:[#allocation2 + $0x38] sm:$0xff] %v175
  %v186 = vld [vmem:[%s4] sm:$0xff]
  %v187 = vld [vmem:[%s4 + $0x8] sm:$0xff]
  %v188 = vld [vmem:[%s4 + $0x10] sm:$0xff]
  %v189 = vld [vmem:[%s4 + $0x18] sm:$0xff]
  %v190 = vld [vmem:[%s4 + $0x20] sm:$0xff]
  %v191 = vld [vmem:[%s4 + $0x28] sm:$0xff]
  %v192 = vld [vmem:[%s4 + $0x30] sm:$0xff]
  %v193 = vld [vmem:[%s4 + $0x38] sm:$0xff]
  %v194 = vld [vmem:[%s4 + $0x40] sm:$0xff]
  %v195 = vld [vmem:[%s4 + $0x48] sm:$0xff]
  %v196 = vld [vmem:[%s4 + $0x50] sm:$0xff]
  %v197 = vld [vmem:[%s4 + $0x58] sm:$0xff]
  %v198 = vld [vmem:[%s4 + $0x60] sm:$0xff]
  %v199 = vld [vmem:[%s4 + $0x68] sm:$0xff]
  %v200 = vld [vmem:[%s4 + $0x70] sm:$0xff]
  %v201 = vld [vmem:[%s4 + $0x78] sm:$0xff]
  %v202 = vld [vmem:[%s1] sm:$0xff]
  %203 = vst [vmem:[#allocation4] sm:$0xff] %v202
  %v204 = vld [vmem:[#allocation4] sm:$0xff]
  %205 = vst [vmem:[#allocation3] sm:$0xff] %v204
  %v206 = vld [vmem:[#allocation2] sm:$0xff]
  %207 = vmatprep.subr.mxu0 0.0
  %208 = vmatpush1.msra.mxu0 %v201
  %209 = vmatprep.subr.mxu0 0.0
  %210 = vmatpush1.msra.mxu0 %v200
  %211 = vmatprep.subr.mxu0 0.0
  %212 = vmatpush1.msra.mxu0 %v199
  %213 = vmatprep.subr.mxu0 0.0
  %214 = vmatpush1.msra.mxu0 %v198
  %215 = vmatprep.subr.mxu0 0.0
  %216 = vmatpush1.msra.mxu0 %v197
  %217 = vmatprep.subr.mxu0 0.0
  %218 = vmatpush1.msra.mxu0 %v196
  %219 = vmatprep.subr.mxu0 0.0
  %220 = vmatpush1.msra.mxu0 %v195
  %221 = vmatprep.subr.mxu0 0.0
  %222 = vmatpush1.msra.mxu0 %v194
  %223 = vmatprep.subr.mxu0 0.0
  %224 = vmatpush1.msra.mxu0 %v193
  %225 = vmatprep.subr.mxu0 0.0
  %226 = vmatpush1.msra.mxu0 %v192
  %227 = vmatprep.subr.mxu0 0.0
  %228 = vmatpush1.msra.mxu0 %v191
  %229 = vmatprep.subr.mxu0 0.0
  %230 = vmatpush1.msra.mxu0 %v190
  %231 = vmatprep.subr.mxu0 0.0
  %232 = vmatpush1.msra.mxu0 %v189
  %233 = vmatprep.subr.mxu0 0.0
  %234 = vmatpush1.msra.mxu0 %v188
  %235 = vmatprep.subr.mxu0 0.0
  %236 = vmatpush1.msra.mxu0 %v187
  %237 = vmatprep.subr.mxu0 0.0
  %238 = vmatpush1.msra.mxu0 %v186
  %239 = vmatprep.subr.mxu0 0.0
  %240 = vmatpush2.msra.mxu0 0.0
  %241 = vmatprep.subr.mxu0 0.0
  %242 = vmatpush2.msra.mxu0 0.0
  %243 = vmatprep.subr.mxu0 0.0
  %244 = vmatpush2.msra.mxu0 0.0
  %245 = vmatprep.subr.mxu0 0.0
  %246 = vmatpush2.msra.mxu0 0.0
  %247 = vmatprep.subr.mxu0 0.0
  %248 = vmatpush2.msra.mxu0 0.0
  %249 = vmatprep.subr.mxu0 0.0
  %250 = vmatpush2.msra.mxu0 0.0
  %251 = vmatprep.subr.mxu0 0.0
  %252 = vmatpush2.msra.mxu0 0.0
  %253 = vmatprep.subr.mxu0 0.0
  %254 = vmatpush2.msra.mxu0 0.0
  %255 = vmatprep.subr.mxu0 0.0
  %256 = vmatpush2.msra.mxu0 0.0
  %257 = vmatprep.subr.mxu0 0.0
  %258 = vmatpush2.msra.mxu0 0.0
  %259 = vmatprep.subr.mxu0 0.0
  %260 = vmatpush2.msra.mxu0 0.0
  %261 = vmatprep.subr.mxu0 0.0
  %262 = vmatpush2.msra.mxu0 0.0
  %263 = vmatprep.subr.mxu0 0.0
  %264 = vmatpush2.msra.mxu0 0.0
  %265 = vmatprep.subr.mxu0 0.0
  %266 = vmatpush2.msra.mxu0 0.0
  %267 = vmatprep.subr.mxu0 0.0
  %268 = vmatpush2.msra.mxu0 0.0
  %269 = vmatprep.subr.mxu0 0.0
  %270 = vmatpush2.msra.mxu0 0.0
  %271 = vmatprep.mubr.f32.mxu0 0.0
  %272 = vmatmul.mubr.f32.gmra.mxu0 %v204
  %v273 = vpop.f32.mrf.mxu0
  %v274 = vadd.f32 %v206, %v273
  %v275 = vpop.f32.mrf.mxu0
  %276 = vdwg.mxu0
  %vm277 = vcmp.gt.f32.partialorder %v274, 0.0
  %v278 = vmul.f32 %v274, 0.01
  %v279 = vsel %vm277, %v274, %v278
  %280 = vst [vmem:[#allocation4] sm:$0xff] %v279
  %v281 = vld [vmem:[#allocation4] sm:$0xff]
  %s282 = scalar_lea.vmem [#allocation3], 8
  %283 = vst [vmem:[%s282] sm:$0xff] %v281
  %s284 = scalar_lea.vmem [#allocation2], 8
  %v285 = vld [vmem:[%s284] sm:$0xff]
  %286 = vmatprep.subr.mxu0 0.0
  %287 = vmatpush1.msra.mxu0 %v201
  %288 = vmatprep.subr.mxu0 0.0
  %289 = vmatpush1.msra.mxu0 %v200
  %290 = vmatprep.subr.mxu0 0.0
  %291 = vmatpush1.msra.mxu0 %v199
  %292 = vmatprep.subr.mxu0 0.0
  %293 = vmatpush1.msra.mxu0 %v198
  %294 = vmatprep.subr.mxu0 0.0
  %295 = vmatpush1.msra.mxu0 %v197
  %296 = vmatprep.subr.mxu0 0.0
  %297 = vmatpush1.msra.mxu0 %v196
  %298 = vmatprep.subr.mxu0 0.0
  %299 = vmatpush1.msra.mxu0 %v195
  %300 = vmatprep.subr.mxu0 0.0
  %301 = vmatpush1.msra.mxu0 %v194
  %302 = vmatprep.subr.mxu0 0.0
  %303 = vmatpush1.msra.mxu0 %v193
  %304 = vmatprep.subr.mxu0 0.0
  %305 = vmatpush1.msra.mxu0 %v192
  %306 = vmatprep.subr.mxu0 0.0
  %307 = vmatpush1.msra.mxu0 %v191
  %308 = vmatprep.subr.mxu0 0.0
  %309 = vmatpush1.msra.mxu0 %v190
  %310 = vmatprep.subr.mxu0 0.0
  %311 = vmatpush1.msra.mxu0 %v189
  %312 = vmatprep.subr.mxu0 0.0
  %313 = vmatpush1.msra.mxu0 %v188
  %314 = vmatprep.subr.mxu0 0.0
  %315 = vmatpush1.msra.mxu0 %v187
  %316 = vmatprep.subr.mxu0 0.0
  %317 = vmatpush1.msra.mxu0 %v186
  %318 = vmatprep.subr.mxu0 0.0
  %319 = vmatpush2.msra.mxu0 0.0
  %320 = vmatprep.subr.mxu0 0.0
  %321 = vmatpush2.msra.mxu0 0.0
  %322 = vmatprep.subr.mxu0 0.0
  %323 = vmatpush2.msra.mxu0 0.0
  %324 = vmatprep.subr.mxu0 0.0
  %325 = vmatpush2.msra.mxu0 0.0
  %326 = vmatprep.subr.mxu0 0.0
  %327 = vmatpush2.msra.mxu0 0.0
  %328 = vmatprep.subr.mxu0 0.0
  %329 = vmatpush2.msra.mxu0 0.0
  %330 = vmatprep.subr.mxu0 0.0
  %331 = vmatpush2.msra.mxu0 0.0
  %332 = vmatprep.subr.mxu0 0.0
  %333 = vmatpush2.msra.mxu0 0.0
  %334 = vmatprep.subr.mxu0 0.0
  %335 = vmatpush2.msra.mxu0 0.0
  %336 = vmatprep.subr.mxu0 0.0
  %337 = vmatpush2.msra.mxu0 0.0
  %338 = vmatprep.subr.mxu0 0.0
  %339 = vmatpush2.msra.mxu0 0.0
  %340 = vmatprep.subr.mxu0 0.0
  %341 = vmatpush2.msra.mxu0 0.0
  %342 = vmatprep.subr.mxu0 0.0
  %343 = vmatpush2.msra.mxu0 0.0
  %344 = vmatprep.subr.mxu0 0.0
  %345 = vmatpush2.msra.mxu0 0.0
  %346 = vmatprep.subr.mxu0 0.0
  %347 = vmatpush2.msra.mxu0 0.0
  %348 = vmatprep.subr.mxu0 0.0
  %349 = vmatpush2.msra.mxu0 0.0
  %350 = vmatprep.mubr.f32.mxu0 0.0
  %351 = vmatmul.mubr.f32.gmra.mxu0 %v281
  %v352 = vpop.f32.mrf.mxu0
  %v353 = vadd.f32 %v285, %v352
  %v354 = vpop.f32.mrf.mxu0
  %355 = vdwg.mxu0
  %vm356 = vcmp.gt.f32.partialorder %v353, 0.0
  %v357 = vmul.f32 %v353, 0.01
  %v358 = vsel %vm356, %v353, %v357
  %359 = vst [vmem:[#allocation4] sm:$0xff] %v358
  %v360 = vld [vmem:[#allocation4] sm:$0xff]
  %s361 = scalar_lea.vmem [#allocation3], 16
  %362 = vst [vmem:[%s361] sm:$0xff] %v360
  %s363 = scalar_lea.vmem [#allocation2], 16
  %v364 = vld [vmem:[%s363] sm:$0xff]
  %365 = vmatprep.subr.mxu0 0.0
  %366 = vmatpush1.msra.mxu0 %v201
  %367 = vmatprep.subr.mxu0 0.0
  %368 = vmatpush1.msra.mxu0 %v200
  %369 = vmatprep.subr.mxu0 0.0
  %370 = vmatpush1.msra.mxu0 %v199
  %371 = vmatprep.subr.mxu0 0.0
  %372 = vmatpush1.msra.mxu0 %v198
  %373 = vmatprep.subr.mxu0 0.0
  %374 = vmatpush1.msra.mxu0 %v197
  %375 = vmatprep.subr.mxu0 0.0
  %376 = vmatpush1.msra.mxu0 %v196
  %377 = vmatprep.subr.mxu0 0.0
  %378 = vmatpush1.msra.mxu0 %v195
  %379 = vmatprep.subr.mxu0 0.0
  %380 = vmatpush1.msra.mxu0 %v194
  %381 = vmatprep.subr.mxu0 0.0
  %382 = vmatpush1.msra.mxu0 %v193
  %383 = vmatprep.subr.mxu0 0.0
  %384 = vmatpush1.msra.mxu0 %v192
  %385 = vmatprep.subr.mxu0 0.0
  %386 = vmatpush1.msra.mxu0 %v191
  %387 = vmatprep.subr.mxu0 0.0
  %388 = vmatpush1.msra.mxu0 %v190
  %389 = vmatprep.subr.mxu0 0.0
  %390 = vmatpush1.msra.mxu0 %v189
  %391 = vmatprep.subr.mxu0 0.0
  %392 = vmatpush1.msra.mxu0 %v188
  %393 = vmatprep.subr.mxu0 0.0
  %394 = vmatpush1.msra.mxu0 %v187
  %395 = vmatprep.subr.mxu0 0.0
  %396 = vmatpush1.msra.mxu0 %v186
  %397 = vmatprep.subr.mxu0 0.0
  %398 = vmatpush2.msra.mxu0 0.0
  %399 = vmatprep.subr.mxu0 0.0
  %400 = vmatpush2.msra.mxu0 0.0
  %401 = vmatprep.subr.mxu0 0.0
  %402 = vmatpush2.msra.mxu0 0.0
  %403 = vmatprep.subr.mxu0 0.0
  %404 = vmatpush2.msra.mxu0 0.0
  %405 = vmatprep.subr.mxu0 0.0
  %406 = vmatpush2.msra.mxu0 0.0
  %407 = vmatprep.subr.mxu0 0.0
  %408 = vmatpush2.msra.mxu0 0.0
  %409 = vmatprep.subr.mxu0 0.0
  %410 = vmatpush2.msra.mxu0 0.0
  %411 = vmatprep.subr.mxu0 0.0
  %412 = vmatpush2.msra.mxu0 0.0
  %413 = vmatprep.subr.mxu0 0.0
  %414 = vmatpush2.msra.mxu0 0.0
  %415 = vmatprep.subr.mxu0 0.0
  %416 = vmatpush2.msra.mxu0 0.0
  %417 = vmatprep.subr.mxu0 0.0
  %418 = vmatpush2.msra.mxu0 0.0
  %419 = vmatprep.subr.mxu0 0.0
  %420 = vmatpush2.msra.mxu0 0.0
  %421 = vmatprep.subr.mxu0 0.0
  %422 = vmatpush2.msra.mxu0 0.0
  %423 = vmatprep.subr.mxu0 0.0
  %424 = vmatpush2.msra.mxu0 0.0
  %425 = vmatprep.subr.mxu0 0.0
  %426 = vmatpush2.msra.mxu0 0.0
  %427 = vmatprep.subr.mxu0 0.0
  %428 = vmatpush2.msra.mxu0 0.0
  %429 = vmatprep.mubr.f32.mxu0 0.0
  %430 = vmatmul.mubr.f32.gmra.mxu0 %v360
  %v431 = vpop.f32.mrf.mxu0
  %v432 = vadd.f32 %v364, %v431
  %v433 = vpop.f32.mrf.mxu0
  %434 = vdwg.mxu0
  %vm435 = vcmp.gt.f32.partialorder %v432, 0.0
  %v436 = vmul.f32 %v432, 0.01
  %v437 = vsel %vm435, %v432, %v436
  %438 = vst [vmem:[#allocation4] sm:$0xff] %v437
  %v439 = vld [vmem:[#allocation4] sm:$0xff]
  %s440 = scalar_lea.vmem [#allocation3], 24
  %441 = vst [vmem:[%s440] sm:$0xff] %v439
  %s442 = scalar_lea.vmem [#allocation2], 24
  %v443 = vld [vmem:[%s442] sm:$0xff]
  %444 = vmatprep.subr.mxu0 0.0
  %445 = vmatpush1.msra.mxu0 %v201
  %446 = vmatprep.subr.mxu0 0.0
  %447 = vmatpush1.msra.mxu0 %v200
  %448 = vmatprep.subr.mxu0 0.0
  %449 = vmatpush1.msra.mxu0 %v199
  %450 = vmatprep.subr.mxu0 0.0
  %451 = vmatpush1.msra.mxu0 %v198
  %452 = vmatprep.subr.mxu0 0.0
  %453 = vmatpush1.msra.mxu0 %v197
  %454 = vmatprep.subr.mxu0 0.0
  %455 = vmatpush1.msra.mxu0 %v196
  %456 = vmatprep.subr.mxu0 0.0
  %457 = vmatpush1.msra.mxu0 %v195
  %458 = vmatprep.subr.mxu0 0.0
  %459 = vmatpush1.msra.mxu0 %v194
  %460 = vmatprep.subr.mxu0 0.0
  %461 = vmatpush1.msra.mxu0 %v193
  %462 = vmatprep.subr.mxu0 0.0
  %463 = vmatpush1.msra.mxu0 %v192
  %464 = vmatprep.subr.mxu0 0.0
  %465 = vmatpush1.msra.mxu0 %v191
  %466 = vmatprep.subr.mxu0 0.0
  %467 = vmatpush1.msra.mxu0 %v190
  %468 = vmatprep.subr.mxu0 0.0
  %469 = vmatpush1.msra.mxu0 %v189
  %470 = vmatprep.subr.mxu0 0.0
  %471 = vmatpush1.msra.mxu0 %v188
  %472 = vmatprep.subr.mxu0 0.0
  %473 = vmatpush1.msra.mxu0 %v187
  %474 = vmatprep.subr.mxu0 0.0
  %475 = vmatpush1.msra.mxu0 %v186
  %476 = vmatprep.subr.mxu0 0.0
  %477 = vmatpush2.msra.mxu0 0.0
  %478 = vmatprep.subr.mxu0 0.0
  %479 = vmatpush2.msra.mxu0 0.0
  %480 = vmatprep.subr.mxu0 0.0
  %481 = vmatpush2.msra.mxu0 0.0
  %482 = vmatprep.subr.mxu0 0.0
  %483 = vmatpush2.msra.mxu0 0.0
  %484 = vmatprep.subr.mxu0 0.0
  %485 = vmatpush2.msra.mxu0 0.0
  %486 = vmatprep.subr.mxu0 0.0
  %487 = vmatpush2.msra.mxu0 0.0
  %488 = vmatprep.subr.mxu0 0.0
  %489 = vmatpush2.msra.mxu0 0.0
  %490 = vmatprep.subr.mxu0 0.0
  %491 = vmatpush2.msra.mxu0 0.0
  %492 = vmatprep.subr.mxu0 0.0
  %493 = vmatpush2.msra.mxu0 0.0
  %494 = vmatprep.subr.mxu0 0.0
  %495 = vmatpush2.msra.mxu0 0.0
  %496 = vmatprep.subr.mxu0 0.0
  %497 = vmatpush2.msra.mxu0 0.0
  %498 = vmatprep.subr.mxu0 0.0
  %499 = vmatpush2.msra.mxu0 0.0
  %500 = vmatprep.subr.mxu0 0.0
  %501 = vmatpush2.msra.mxu0 0.0
  %502 = vmatprep.subr.mxu0 0.0
  %503 = vmatpush2.msra.mxu0 0.0
  %504 = vmatprep.subr.mxu0 0.0
  %505 = vmatpush2.msra.mxu0 0.0
  %506 = vmatprep.subr.mxu0 0.0
  %507 = vmatpush2.msra.mxu0 0.0
  %508 = vmatprep.mubr.f32.mxu0 0.0
  %509 = vmatmul.mubr.f32.gmra.mxu0 %v439
  %v510 = vpop.f32.mrf.mxu0
  %v511 = vadd.f32 %v443, %v510
  %v512 = vpop.f32.mrf.mxu0
  %513 = vdwg.mxu0
  %vm514 = vcmp.gt.f32.partialorder %v511, 0.0
  %v515 = vmul.f32 %v511, 0.01
  %v516 = vsel %vm514, %v511, %v515
  %517 = vst [vmem:[#allocation4] sm:$0xff] %v516
  %v518 = vld [vmem:[#allocation4] sm:$0xff]
  %s519 = scalar_lea.vmem [#allocation3], 32
  %520 = vst [vmem:[%s519] sm:$0xff] %v518
  %s521 = scalar_lea.vmem [#allocation2], 32
  %v522 = vld [vmem:[%s521] sm:$0xff]
  %523 = vmatprep.subr.mxu0 0.0
  %524 = vmatpush1.msra.mxu0 %v201
  %525 = vmatprep.subr.mxu0 0.0
  %526 = vmatpush1.msra.mxu0 %v200
  %527 = vmatprep.subr.mxu0 0.0
  %528 = vmatpush1.msra.mxu0 %v199
  %529 = vmatprep.subr.mxu0 0.0
  %530 = vmatpush1.msra.mxu0 %v198
  %531 = vmatprep.subr.mxu0 0.0
  %532 = vmatpush1.msra.mxu0 %v197
  %533 = vmatprep.subr.mxu0 0.0
  %534 = vmatpush1.msra.mxu0 %v196
  %535 = vmatprep.subr.mxu0 0.0
  %536 = vmatpush1.msra.mxu0 %v195
  %537 = vmatprep.subr.mxu0 0.0
  %538 = vmatpush1.msra.mxu0 %v194
  %539 = vmatprep.subr.mxu0 0.0
  %540 = vmatpush1.msra.mxu0 %v193
  %541 = vmatprep.subr.mxu0 0.0
  %542 = vmatpush1.msra.mxu0 %v192
  %543 = vmatprep.subr.mxu0 0.0
  %544 = vmatpush1.msra.mxu0 %v191
  %545 = vmatprep.subr.mxu0 0.0
  %546 = vmatpush1.msra.mxu0 %v190
  %547 = vmatprep.subr.mxu0 0.0
  %548 = vmatpush1.msra.mxu0 %v189
  %549 = vmatprep.subr.mxu0 0.0
  %550 = vmatpush1.msra.mxu0 %v188
  %551 = vmatprep.subr.mxu0 0.0
  %552 = vmatpush1.msra.mxu0 %v187
  %553 = vmatprep.subr.mxu0 0.0
  %554 = vmatpush1.msra.mxu0 %v186
  %555 = vmatprep.subr.mxu0 0.0
  %556 = vmatpush2.msra.mxu0 0.0
  %557 = vmatprep.subr.mxu0 0.0
  %558 = vmatpush2.msra.mxu0 0.0
  %559 = vmatprep.subr.mxu0 0.0
  %560 = vmatpush2.msra.mxu0 0.0
  %561 = vmatprep.subr.mxu0 0.0
  %562 = vmatpush2.msra.mxu0 0.0
  %563 = vmatprep.subr.mxu0 0.0
  %564 = vmatpush2.msra.mxu0 0.0
  %565 = vmatprep.subr.mxu0 0.0
  %566 = vmatpush2.msra.mxu0 0.0
  %567 = vmatprep.subr.mxu0 0.0
  %568 = vmatpush2.msra.mxu0 0.0
  %569 = vmatprep.subr.mxu0 0.0
  %570 = vmatpush2.msra.mxu0 0.0
  %571 = vmatprep.subr.mxu0 0.0
  %572 = vmatpush2.msra.mxu0 0.0
  %573 = vmatprep.subr.mxu0 0.0
  %574 = vmatpush2.msra.mxu0 0.0
  %575 = vmatprep.subr.mxu0 0.0
  %576 = vmatpush2.msra.mxu0 0.0
  %577 = vmatprep.subr.mxu0 0.0
  %578 = vmatpush2.msra.mxu0 0.0
  %579 = vmatprep.subr.mxu0 0.0
  %580 = vmatpush2.msra.mxu0 0.0
  %581 = vmatprep.subr.mxu0 0.0
  %582 = vmatpush2.msra.mxu0 0.0
  %583 = vmatprep.subr.mxu0 0.0
  %584 = vmatpush2.msra.mxu0 0.0
  %585 = vmatprep.subr.mxu0 0.0
  %586 = vmatpush2.msra.mxu0 0.0
  %587 = vmatprep.mubr.f32.mxu0 0.0
  %588 = vmatmul.mubr.f32.gmra.mxu0 %v518
  %v589 = vpop.f32.mrf.mxu0
  %v590 = vadd.f32 %v522, %v589
  %v591 = vpop.f32.mrf.mxu0
  %592 = vdwg.mxu0
  %vm593 = vcmp.gt.f32.partialorder %v590, 0.0
  %v594 = vmul.f32 %v590, 0.01
  %v595 = vsel %vm593, %v590, %v594
  %596 = vst [vmem:[#allocation4] sm:$0xff] %v595
  %v597 = vld [vmem:[#allocation4] sm:$0xff]
  %s598 = scalar_lea.vmem [#allocation3], 40
  %599 = vst [vmem:[%s598] sm:$0xff] %v597
  %s600 = scalar_lea.vmem [#allocation2], 40
  %v601 = vld [vmem:[%s600] sm:$0xff]
  %602 = vmatprep.subr.mxu0 0.0
  %603 = vmatpush1.msra.mxu0 %v201
  %604 = vmatprep.subr.mxu0 0.0
  %605 = vmatpush1.msra.mxu0 %v200
  %606 = vmatprep.subr.mxu0 0.0
  %607 = vmatpush1.msra.mxu0 %v199
  %608 = vmatprep.subr.mxu0 0.0
  %609 = vmatpush1.msra.mxu0 %v198
  %610 = vmatprep.subr.mxu0 0.0
  %611 = vmatpush1.msra.mxu0 %v197
  %612 = vmatprep.subr.mxu0 0.0
  %613 = vmatpush1.msra.mxu0 %v196
  %614 = vmatprep.subr.mxu0 0.0
  %615 = vmatpush1.msra.mxu0 %v195
  %616 = vmatprep.subr.mxu0 0.0
  %617 = vmatpush1.msra.mxu0 %v194
  %618 = vmatprep.subr.mxu0 0.0
  %619 = vmatpush1.msra.mxu0 %v193
  %620 = vmatprep.subr.mxu0 0.0
  %621 = vmatpush1.msra.mxu0 %v192
  %622 = vmatprep.subr.mxu0 0.0
  %623 = vmatpush1.msra.mxu0 %v191
  %624 = vmatprep.subr.mxu0 0.0
  %625 = vmatpush1.msra.mxu0 %v190
  %626 = vmatprep.subr.mxu0 0.0
  %627 = vmatpush1.msra.mxu0 %v189
  %628 = vmatprep.subr.mxu0 0.0
  %629 = vmatpush1.msra.mxu0 %v188
  %630 = vmatprep.subr.mxu0 0.0
  %631 = vmatpush1.msra.mxu0 %v187
  %632 = vmatprep.subr.mxu0 0.0
  %633 = vmatpush1.msra.mxu0 %v186
  %634 = vmatprep.subr.mxu0 0.0
  %635 = vmatpush2.msra.mxu0 0.0
  %636 = vmatprep.subr.mxu0 0.0
  %637 = vmatpush2.msra.mxu0 0.0
  %638 = vmatprep.subr.mxu0 0.0
  %639 = vmatpush2.msra.mxu0 0.0
  %640 = vmatprep.subr.mxu0 0.0
  %641 = vmatpush2.msra.mxu0 0.0
  %642 = vmatprep.subr.mxu0 0.0
  %643 = vmatpush2.msra.mxu0 0.0
  %644 = vmatprep.subr.mxu0 0.0
  %645 = vmatpush2.msra.mxu0 0.0
  %646 = vmatprep.subr.mxu0 0.0
  %647 = vmatpush2.msra.mxu0 0.0
  %648 = vmatprep.subr.mxu0 0.0
  %649 = vmatpush2.msra.mxu0 0.0
  %650 = vmatprep.subr.mxu0 0.0
  %651 = vmatpush2.msra.mxu0 0.0
  %652 = vmatprep.subr.mxu0 0.0
  %653 = vmatpush2.msra.mxu0 0.0
  %654 = vmatprep.subr.mxu0 0.0
  %655 = vmatpush2.msra.mxu0 0.0
  %656 = vmatprep.subr.mxu0 0.0
  %657 = vmatpush2.msra.mxu0 0.0
  %658 = vmatprep.subr.mxu0 0.0
  %659 = vmatpush2.msra.mxu0 0.0
  %660 = vmatprep.subr.mxu0 0.0
  %661 = vmatpush2.msra.mxu0 0.0
  %662 = vmatprep.subr.mxu0 0.0
  %663 = vmatpush2.msra.mxu0 0.0
  %664 = vmatprep.subr.mxu0 0.0
  %665 = vmatpush2.msra.mxu0 0.0
  %666 = vmatprep.mubr.f32.mxu0 0.0
  %667 = vmatmul.mubr.f32.gmra.mxu0 %v597
  %v668 = vpop.f32.mrf.mxu0
  %v669 = vadd.f32 %v601, %v668
  %v670 = vpop.f32.mrf.mxu0
  %671 = vdwg.mxu0
  %vm672 = vcmp.gt.f32.partialorder %v669, 0.0
  %v673 = vmul.f32 %v669, 0.01
  %v674 = vsel %vm672, %v669, %v673
  %675 = vst [vmem:[#allocation4] sm:$0xff] %v674
  %v676 = vld [vmem:[#allocation4] sm:$0xff]
  %s677 = scalar_lea.vmem [#allocation3], 48
  %678 = vst [vmem:[%s677] sm:$0xff] %v676
  %s679 = scalar_lea.vmem [#allocation2], 48
  %v680 = vld [vmem:[%s679] sm:$0xff]
  %681 = vmatprep.subr.mxu0 0.0
  %682 = vmatpush1.msra.mxu0 %v201
  %683 = vmatprep.subr.mxu0 0.0
  %684 = vmatpush1.msra.mxu0 %v200
  %685 = vmatprep.subr.mxu0 0.0
  %686 = vmatpush1.msra.mxu0 %v199
  %687 = vmatprep.subr.mxu0 0.0
  %688 = vmatpush1.msra.mxu0 %v198
  %689 = vmatprep.subr.mxu0 0.0
  %690 = vmatpush1.msra.mxu0 %v197
  %691 = vmatprep.subr.mxu0 0.0
  %692 = vmatpush1.msra.mxu0 %v196
  %693 = vmatprep.subr.mxu0 0.0
  %694 = vmatpush1.msra.mxu0 %v195
  %695 = vmatprep.subr.mxu0 0.0
  %696 = vmatpush1.msra.mxu0 %v194
  %697 = vmatprep.subr.mxu0 0.0
  %698 = vmatpush1.msra.mxu0 %v193
  %699 = vmatprep.subr.mxu0 0.0
  %700 = vmatpush1.msra.mxu0 %v192
  %701 = vmatprep.subr.mxu0 0.0
  %702 = vmatpush1.msra.mxu0 %v191
  %703 = vmatprep.subr.mxu0 0.0
  %704 = vmatpush1.msra.mxu0 %v190
  %705 = vmatprep.subr.mxu0 0.0
  %706 = vmatpush1.msra.mxu0 %v189
  %707 = vmatprep.subr.mxu0 0.0
  %708 = vmatpush1.msra.mxu0 %v188
  %709 = vmatprep.subr.mxu0 0.0
  %710 = vmatpush1.msra.mxu0 %v187
  %711 = vmatprep.subr.mxu0 0.0
  %712 = vmatpush1.msra.mxu0 %v186
  %713 = vmatprep.subr.mxu0 0.0
  %714 = vmatpush2.msra.mxu0 0.0
  %715 = vmatprep.subr.mxu0 0.0
  %716 = vmatpush2.msra.mxu0 0.0
  %717 = vmatprep.subr.mxu0 0.0
  %718 = vmatpush2.msra.mxu0 0.0
  %719 = vmatprep.subr.mxu0 0.0
  %720 = vmatpush2.msra.mxu0 0.0
  %721 = vmatprep.subr.mxu0 0.0
  %722 = vmatpush2.msra.mxu0 0.0
  %723 = vmatprep.subr.mxu0 0.0
  %724 = vmatpush2.msra.mxu0 0.0
  %725 = vmatprep.subr.mxu0 0.0
  %726 = vmatpush2.msra.mxu0 0.0
  %727 = vmatprep.subr.mxu0 0.0
  %728 = vmatpush2.msra.mxu0 0.0
  %729 = vmatprep.subr.mxu0 0.0
  %730 = vmatpush2.msra.mxu0 0.0
  %731 = vmatprep.subr.mxu0 0.0
  %732 = vmatpush2.msra.mxu0 0.0
  %733 = vmatprep.subr.mxu0 0.0
  %734 = vmatpush2.msra.mxu0 0.0
  %735 = vmatprep.subr.mxu0 0.0
  %736 = vmatpush2.msra.mxu0 0.0
  %737 = vmatprep.subr.mxu0 0.0
  %738 = vmatpush2.msra.mxu0 0.0
  %739 = vmatprep.subr.mxu0 0.0
  %740 = vmatpush2.msra.mxu0 0.0
  %741 = vmatprep.subr.mxu0 0.0
  %742 = vmatpush2.msra.mxu0 0.0
  %743 = vmatprep.subr.mxu0 0.0
  %744 = vmatpush2.msra.mxu0 0.0
  %745 = vmatprep.mubr.f32.mxu0 0.0
  %746 = vmatmul.mubr.f32.gmra.mxu0 %v676
  %v747 = vpop.f32.mrf.mxu0
  %v748 = vadd.f32 %v680, %v747
  %v749 = vpop.f32.mrf.mxu0
  %750 = vdwg.mxu0
  %vm751 = vcmp.gt.f32.partialorder %v748, 0.0
  %v752 = vmul.f32 %v748, 0.01
  %v753 = vsel %vm751, %v748, %v752
  %754 = vst [vmem:[#allocation4] sm:$0xff] %v753
  %v755 = vld [vmem:[#allocation4] sm:$0xff]
  %s756 = scalar_lea.vmem [#allocation3], 56
  %757 = vst [vmem:[%s756] sm:$0xff] %v755
  %s758 = scalar_lea.vmem [#allocation2], 56
  %v759 = vld [vmem:[%s758] sm:$0xff]
  %760 = vmatprep.subr.mxu0 0.0
  %761 = vmatpush1.msra.mxu0 %v201
  %762 = vmatprep.subr.mxu0 0.0
  %763 = vmatpush1.msra.mxu0 %v200
  %764 = vmatprep.subr.mxu0 0.0
  %765 = vmatpush1.msra.mxu0 %v199
  %766 = vmatprep.subr.mxu0 0.0
  %767 = vmatpush1.msra.mxu0 %v198
  %768 = vmatprep.subr.mxu0 0.0
  %769 = vmatpush1.msra.mxu0 %v197
  %770 = vmatprep.subr.mxu0 0.0
  %771 = vmatpush1.msra.mxu0 %v196
  %772 = vmatprep.subr.mxu0 0.0
  %773 = vmatpush1.msra.mxu0 %v195
  %774 = vmatprep.subr.mxu0 0.0
  %775 = vmatpush1.msra.mxu0 %v194
  %776 = vmatprep.subr.mxu0 0.0
  %777 = vmatpush1.msra.mxu0 %v193
  %778 = vmatprep.subr.mxu0 0.0
  %779 = vmatpush1.msra.mxu0 %v192
  %780 = vmatprep.subr.mxu0 0.0
  %781 = vmatpush1.msra.mxu0 %v191
  %782 = vmatprep.subr.mxu0 0.0
  %783 = vmatpush1.msra.mxu0 %v190
  %784 = vmatprep.subr.mxu0 0.0
  %785 = vmatpush1.msra.mxu0 %v189
  %786 = vmatprep.subr.mxu0 0.0
  %787 = vmatpush1.msra.mxu0 %v188
  %788 = vmatprep.subr.mxu0 0.0
  %789 = vmatpush1.msra.mxu0 %v187
  %790 = vmatprep.subr.mxu0 0.0
  %791 = vmatpush1.msra.mxu0 %v186
  %792 = vmatprep.subr.mxu0 0.0
  %793 = vmatpush2.msra.mxu0 0.0
  %794 = vmatprep.subr.mxu0 0.0
  %795 = vmatpush2.msra.mxu0 0.0
  %796 = vmatprep.subr.mxu0 0.0
  %797 = vmatpush2.msra.mxu0 0.0
  %798 = vmatprep.subr.mxu0 0.0
  %799 = vmatpush2.msra.mxu0 0.0
  %800 = vmatprep.subr.mxu0 0.0
  %801 = vmatpush2.msra.mxu0 0.0
  %802 = vmatprep.subr.mxu0 0.0
  %803 = vmatpush2.msra.mxu0 0.0
  %804 = vmatprep.subr.mxu0 0.0
  %805 = vmatpush2.msra.mxu0 0.0
  %806 = vmatprep.subr.mxu0 0.0
  %807 = vmatpush2.msra.mxu0 0.0
  %808 = vmatprep.subr.mxu0 0.0
  %809 = vmatpush2.msra.mxu0 0.0
  %810 = vmatprep.subr.mxu0 0.0
  %811 = vmatpush2.msra.mxu0 0.0
  %812 = vmatprep.subr.mxu0 0.0
  %813 = vmatpush2.msra.mxu0 0.0
  %814 = vmatprep.subr.mxu0 0.0
  %815 = vmatpush2.msra.mxu0 0.0
  %816 = vmatprep.subr.mxu0 0.0
  %817 = vmatpush2.msra.mxu0 0.0
  %818 = vmatprep.subr.mxu0 0.0
  %819 = vmatpush2.msra.mxu0 0.0
  %820 = vmatprep.subr.mxu0 0.0
  %821 = vmatpush2.msra.mxu0 0.0
  %822 = vmatprep.subr.mxu0 0.0
  %823 = vmatpush2.msra.mxu0 0.0
  %824 = vmatprep.mubr.f32.mxu0 0.0
  %825 = vmatmul.mubr.f32.gmra.mxu0 %v755
  %v826 = vpop.f32.mrf.mxu0
  %v827 = vadd.f32 %v759, %v826
  %v828 = vpop.f32.mrf.mxu0
  %829 = vdwg.mxu0
  %vm830 = vcmp.gt.f32.partialorder %v827, 0.0
  %v831 = vmul.f32 %v827, 0.01
  %v832 = vsel %vm830, %v827, %v831
  %833 = vst [vmem:[#allocation4] sm:$0xff] %v832
  %v834 = vld [vmem:[#allocation4] sm:$0xff]
  %835 = vst [vmem:[%s9] sm:$0xff] %v834
  %v836 = vld [vmem:[#allocation3] sm:$0xff]
  %v837 = vld [vmem:[#allocation3 + $0x8] sm:$0xff]
  %v838 = vld [vmem:[#allocation3 + $0x10] sm:$0xff]
  %v839 = vld [vmem:[#allocation3 + $0x18] sm:$0xff]
  %v840 = vld [vmem:[#allocation3 + $0x20] sm:$0xff]
  %v841 = vld [vmem:[#allocation3 + $0x28] sm:$0xff]
  %v842 = vld [vmem:[#allocation3 + $0x30] sm:$0xff]
  %v843 = vld [vmem:[#allocation3 + $0x38] sm:$0xff]
  %v844 = vld [vmem:[%s0] sm:$0xff]
  %v845 = vld [vmem:[%s0 + $0x8] sm:$0xff]
  %v846 = vld [vmem:[%s0 + $0x10] sm:$0xff]
  %v847 = vld [vmem:[%s0 + $0x18] sm:$0xff]
  %v848 = vld [vmem:[%s0 + $0x20] sm:$0xff]
  %v849 = vld [vmem:[%s0 + $0x28] sm:$0xff]
  %v850 = vld [vmem:[%s0 + $0x30] sm:$0xff]
  %v851 = vld [vmem:[%s0 + $0x38] sm:$0xff]
  %v852 = vld [vmem:[%s3] sm:$0xff]
  %v853 = vld [vmem:[%s3 + $0x8] sm:$0xff]
  %v854 = vld [vmem:[%s5] sm:$0xff]
  %v855 = vld [vmem:[%s5 + $0x8] sm:$0xff]
  %v856 = vld [vmem:[%s5 + $0x10] sm:$0xff]
  %v857 = vld [vmem:[%s5 + $0x18] sm:$0xff]
  %v858 = vld [vmem:[%s5 + $0x20] sm:$0xff]
  %v859 = vld [vmem:[%s5 + $0x28] sm:$0xff]
  %v860 = vld [vmem:[%s5 + $0x30] sm:$0xff]
  %v861 = vld [vmem:[%s5 + $0x38] sm:$0xff]
  %v862 = vld [vmem:[%s5 + $0x40] sm:$0xff]
  %v863 = vld [vmem:[%s5 + $0x48] sm:$0xff]
  %v864 = vld [vmem:[%s5 + $0x50] sm:$0xff]
  %v865 = vld [vmem:[%s5 + $0x58] sm:$0xff]
  %v866 = vld [vmem:[%s5 + $0x60] sm:$0xff]
  %v867 = vld [vmem:[%s5 + $0x68] sm:$0xff]
  %v868 = vld [vmem:[%s5 + $0x70] sm:$0xff]
  %v869 = vld [vmem:[%s5 + $0x78] sm:$0xff]
  %870 = vmatprep.subr.mxu0 0.0
  %871 = vmatpush1.msra.mxu0 %v869
  %872 = vmatprep.subr.mxu0 0.0
  %873 = vmatpush1.msra.mxu0 %v868
  %874 = vmatprep.subr.mxu0 0.0
  %875 = vmatpush1.msra.mxu0 %v867
  %876 = vmatprep.subr.mxu0 0.0
  %877 = vmatpush1.msra.mxu0 %v866
  %878 = vmatprep.subr.mxu0 0.0
  %879 = vmatpush1.msra.mxu0 %v865
  %880 = vmatprep.subr.mxu0 0.0
  %881 = vmatpush1.msra.mxu0 %v864
  %882 = vmatprep.subr.mxu0 0.0
  %883 = vmatpush1.msra.mxu0 %v863
  %884 = vmatprep.subr.mxu0 0.0
  %885 = vmatpush1.msra.mxu0 %v862
  %886 = vmatprep.subr.mxu0 0.0
  %887 = vmatpush1.msra.mxu0 %v861
  %888 = vmatprep.subr.mxu0 0.0
  %889 = vmatpush1.msra.mxu0 %v860
  %890 = vmatprep.subr.mxu0 0.0
  %891 = vmatpush1.msra.mxu0 %v859
  %892 = vmatprep.subr.mxu0 0.0
  %893 = vmatpush1.msra.mxu0 %v858
  %894 = vmatprep.subr.mxu0 0.0
  %895 = vmatpush1.msra.mxu0 %v857
  %896 = vmatprep.subr.mxu0 0.0
  %897 = vmatpush1.msra.mxu0 %v856
  %898 = vmatprep.subr.mxu0 0.0
  %899 = vmatpush1.msra.mxu0 %v855
  %900 = vmatprep.subr.mxu0 0.0
  %901 = vmatpush1.msra.mxu0 %v854
  %902 = vmatprep.subr.mxu0 0.0
  %903 = vmatpush2.msra.mxu0 0.0
  %904 = vmatprep.subr.mxu0 0.0
  %905 = vmatpush2.msra.mxu0 0.0
  %906 = vmatprep.subr.mxu0 0.0
  %907 = vmatpush2.msra.mxu0 0.0
  %908 = vmatprep.subr.mxu0 0.0
  %909 = vmatpush2.msra.mxu0 0.0
  %910 = vmatprep.subr.mxu0 0.0
  %911 = vmatpush2.msra.mxu0 0.0
  %912 = vmatprep.subr.mxu0 0.0
  %913 = vmatpush2.msra.mxu0 0.0
  %914 = vmatprep.subr.mxu0 0.0
  %915 = vmatpush2.msra.mxu0 0.0
  %916 = vmatprep.subr.mxu0 0.0
  %917 = vmatpush2.msra.mxu0 0.0
  %918 = vmatprep.subr.mxu0 0.0
  %919 = vmatpush2.msra.mxu0 0.0
  %920 = vmatprep.subr.mxu0 0.0
  %921 = vmatpush2.msra.mxu0 0.0
  %922 = vmatprep.subr.mxu0 0.0
  %923 = vmatpush2.msra.mxu0 0.0
  %924 = vmatprep.subr.mxu0 0.0
  %925 = vmatpush2.msra.mxu0 0.0
  %926 = vmatprep.subr.mxu0 0.0
  %927 = vmatpush2.msra.mxu0 0.0
  %928 = vmatprep.subr.mxu0 0.0
  %929 = vmatpush2.msra.mxu0 0.0
  %930 = vmatprep.subr.mxu0 0.0
  %931 = vmatpush2.msra.mxu0 0.0
  %932 = vmatprep.subr.mxu0 0.0
  %933 = vmatpush2.msra.mxu0 0.0
  %934 = vmatprep.mubr.f32.mxu0 0.0
  %935 = vmatmul.mubr.f32.gmra.mxu0 %v836
  %v936 = vpop.f32.mrf.mxu0
  %v937 = vadd.f32 0.0, %v936
  %v938 = vpop.f32.mrf.mxu0
  %939 = vmatprep.mubr.f32.mxu0 0.0
  %940 = vmatmul.mubr.f32.gmra.mxu0 %v837
  %v941 = vpop.f32.mrf.mxu0
  %v942 = vadd.f32 0.0, %v941
  %v943 = vpop.f32.mrf.mxu0
  %944 = vmatprep.mubr.f32.mxu0 0.0
  %945 = vmatmul.mubr.f32.gmra.mxu0 %v838
  %v946 = vpop.f32.mrf.mxu0
  %v947 = vadd.f32 0.0, %v946
  %v948 = vpop.f32.mrf.mxu0
  %949 = vmatprep.mubr.f32.mxu0 0.0
  %950 = vmatmul.mubr.f32.gmra.mxu0 %v839
  %v951 = vpop.f32.mrf.mxu0
  %v952 = vadd.f32 0.0, %v951
  %v953 = vpop.f32.mrf.mxu0
  %954 = vmatprep.mubr.f32.mxu0 0.0
  %955 = vmatmul.mubr.f32.gmra.mxu0 %v840
  %v956 = vpop.f32.mrf.mxu0
  %v957 = vadd.f32 0.0, %v956
  %v958 = vpop.f32.mrf.mxu0
  %959 = vmatprep.mubr.f32.mxu0 0.0
  %960 = vmatmul.mubr.f32.gmra.mxu0 %v841
  %v961 = vpop.f32.mrf.mxu0
  %v962 = vadd.f32 0.0, %v961
  %v963 = vpop.f32.mrf.mxu0
  %964 = vmatprep.mubr.f32.mxu0 0.0
  %965 = vmatmul.mubr.f32.gmra.mxu0 %v842
  %v966 = vpop.f32.mrf.mxu0
  %v967 = vadd.f32 0.0, %v966
  %v968 = vpop.f32.mrf.mxu0
  %969 = vmatprep.mubr.f32.mxu0 0.0
  %970 = vmatmul.mubr.f32.gmra.mxu0 %v843
  %v971 = vpop.f32.mrf.mxu0
  %v972 = vadd.f32 0.0, %v971
  %v973 = vpop.f32.mrf.mxu0
  %974 = vdwg.mxu0
  %v976 = vsel %vm48, %v844, 0
  %v979 = vsel %vm48, %v845, 0
  %v982 = vsel %vm48, %v846, 0
  %v985 = vsel %vm48, %v847, 0
  %v988 = vsel %vm48, %v848, 0
  %v991 = vsel %vm48, %v849, 0
  %v994 = vsel %vm48, %v850, 0
  %v997 = vsel %vm48, %v851, 0
  %999 = vmatprep.subr.mxu0 0.0
  %1000 = vmatpush1.msra.mxu0 0.0
  %1001 = vmatprep.subr.mxu0 0.0
  %1002 = vmatpush1.msra.mxu0 0.0
  %1003 = vmatprep.subr.mxu0 0.0
  %1004 = vmatpush1.msra.mxu0 0.0
  %1005 = vmatprep.subr.mxu0 0.0
  %1006 = vmatpush1.msra.mxu0 0.0
  %1007 = vmatprep.subr.mxu0 0.0
  %1008 = vmatpush1.msra.mxu0 0.0
  %1009 = vmatprep.subr.mxu0 0.0
  %1010 = vmatpush1.msra.mxu0 0.0
  %1011 = vmatprep.subr.mxu0 0.0
  %1012 = vmatpush1.msra.mxu0 0.0
  %1013 = vmatprep.subr.mxu0 0.0
  %1014 = vmatpush1.msra.mxu0 0.0
  %1015 = vmatprep.subr.mxu0 0.0
  %1016 = vmatpush1.msra.mxu0 0.0
  %1017 = vmatprep.subr.mxu0 0.0
  %1018 = vmatpush1.msra.mxu0 0.0
  %1019 = vmatprep.subr.mxu0 0.0
  %1020 = vmatpush1.msra.mxu0 0.0
  %1021 = vmatprep.subr.mxu0 0.0
  %1022 = vmatpush1.msra.mxu0 0.0
  %1023 = vmatprep.subr.mxu0 0.0
  %1024 = vmatpush1.msra.mxu0 0.0
  %1025 = vmatprep.subr.mxu0 0.0
  %1026 = vmatpush1.msra.mxu0 0.0
  %1027 = vmatprep.subr.mxu0 0.0
  %1028 = vmatpush1.msra.mxu0 %v853
  %1029 = vmatprep.subr.mxu0 0.0
  %1030 = vmatpush1.msra.mxu0 %v852
  %1031 = vmatprep.subr.mxu0 0.0
  %1032 = vmatpush2.msra.mxu0 0.0
  %1033 = vmatprep.subr.mxu0 0.0
  %1034 = vmatpush2.msra.mxu0 0.0
  %1035 = vmatprep.subr.mxu0 0.0
  %1036 = vmatpush2.msra.mxu0 0.0
  %1037 = vmatprep.subr.mxu0 0.0
  %1038 = vmatpush2.msra.mxu0 0.0
  %1039 = vmatprep.subr.mxu0 0.0
  %1040 = vmatpush2.msra.mxu0 0.0
  %1041 = vmatprep.subr.mxu0 0.0
  %1042 = vmatpush2.msra.mxu0 0.0
  %1043 = vmatprep.subr.mxu0 0.0
  %1044 = vmatpush2.msra.mxu0 0.0
  %1045 = vmatprep.subr.mxu0 0.0
  %1046 = vmatpush2.msra.mxu0 0.0
  %1047 = vmatprep.subr.mxu0 0.0
  %1048 = vmatpush2.msra.mxu0 0.0
  %1049 = vmatprep.subr.mxu0 0.0
  %1050 = vmatpush2.msra.mxu0 0.0
  %1051 = vmatprep.subr.mxu0 0.0
  %1052 = vmatpush2.msra.mxu0 0.0
  %1053 = vmatprep.subr.mxu0 0.0
  %1054 = vmatpush2.msra.mxu0 0.0
  %1055 = vmatprep.subr.mxu0 0.0
  %1056 = vmatpush2.msra.mxu0 0.0
  %1057 = vmatprep.subr.mxu0 0.0
  %1058 = vmatpush2.msra.mxu0 0.0
  %1059 = vmatprep.subr.mxu0 0.0
  %1060 = vmatpush2.msra.mxu0 0.0
  %1061 = vmatprep.subr.mxu0 0.0
  %1062 = vmatpush2.msra.mxu0 0.0
  %1063 = vmatprep.mubr.f32.mxu0 0.0
  %1064 = vmatmul.mubr.f32.gmra.mxu0 %v976
  %v1065 = vpop.f32.mrf.mxu0
  %v1066 = vadd.f32 %v937, %v1065
  %v1067 = vpop.f32.mrf.mxu0
  %1068 = vmatprep.mubr.f32.mxu0 0.0
  %1069 = vmatmul.mubr.f32.gmra.mxu0 %v979
  %v1070 = vpop.f32.mrf.mxu0
  %v1071 = vadd.f32 %v942, %v1070
  %v1072 = vpop.f32.mrf.mxu0
  %1073 = vmatprep.mubr.f32.mxu0 0.0
  %1074 = vmatmul.mubr.f32.gmra.mxu0 %v982
  %v1075 = vpop.f32.mrf.mxu0
  %v1076 = vadd.f32 %v947, %v1075
  %v1077 = vpop.f32.mrf.mxu0
  %1078 = vmatprep.mubr.f32.mxu0 0.0
  %1079 = vmatmul.mubr.f32.gmra.mxu0 %v985
  %v1080 = vpop.f32.mrf.mxu0
  %v1081 = vadd.f32 %v952, %v1080
  %v1082 = vpop.f32.mrf.mxu0
  %1083 = vmatprep.mubr.f32.mxu0 0.0
  %1084 = vmatmul.mubr.f32.gmra.mxu0 %v988
  %v1085 = vpop.f32.mrf.mxu0
  %v1086 = vadd.f32 %v957, %v1085
  %v1087 = vpop.f32.mrf.mxu0
  %1088 = vmatprep.mubr.f32.mxu0 0.0
  %1089 = vmatmul.mubr.f32.gmra.mxu0 %v991
  %v1090 = vpop.f32.mrf.mxu0
  %v1091 = vadd.f32 %v962, %v1090
  %v1092 = vpop.f32.mrf.mxu0
  %1093 = vmatprep.mubr.f32.mxu0 0.0
  %1094 = vmatmul.mubr.f32.gmra.mxu0 %v994
  %v1095 = vpop.f32.mrf.mxu0
  %v1096 = vadd.f32 %v967, %v1095
  %v1097 = vpop.f32.mrf.mxu0
  %1098 = vmatprep.mubr.f32.mxu0 0.0
  %1099 = vmatmul.mubr.f32.gmra.mxu0 %v997
  %v1100 = vpop.f32.mrf.mxu0
  %v1101 = vadd.f32 %v972, %v1100
  %v1102 = vpop.f32.mrf.mxu0
  %1103 = vdwg.mxu0
  %v1104 = vld [vmem:[%s7] sm:$0x1]
  %v1106 = vlaneseq
  %v1107 = vshrl.u32 %v1106, 7
  %v1108 = vsub.s32 0, %v1107
  %v1109 = vrot.slane %v1104, %v1108
  %v1111 = vadd.f32 %v1066, %v1109
  %v1112 = vadd.f32 %v1071, %v1109
  %v1113 = vadd.f32 %v1076, %v1109
  %v1114 = vadd.f32 %v1081, %v1109
  %v1115 = vadd.f32 %v1086, %v1109
  %v1116 = vadd.f32 %v1091, %v1109
  %v1117 = vadd.f32 %v1096, %v1109
  %v1118 = vadd.f32 %v1101, %v1109
  %vm1119 = vcmp.gt.f32.partialorder %v1111, 0.0
  %vm1120 = vcmp.gt.f32.partialorder %v1112, 0.0
  %vm1121 = vcmp.gt.f32.partialorder %v1113, 0.0
  %vm1122 = vcmp.gt.f32.partialorder %v1114, 0.0
  %vm1123 = vcmp.gt.f32.partialorder %v1115, 0.0
  %vm1124 = vcmp.gt.f32.partialorder %v1116, 0.0
  %vm1125 = vcmp.gt.f32.partialorder %v1117, 0.0
  %vm1126 = vcmp.gt.f32.partialorder %v1118, 0.0
  %v1127 = vmul.f32 %v1111, 0.01
  %v1128 = vmul.f32 %v1112, 0.01
  %v1129 = vmul.f32 %v1113, 0.01
  %v1130 = vmul.f32 %v1114, 0.01
  %v1131 = vmul.f32 %v1115, 0.01
  %v1132 = vmul.f32 %v1116, 0.01
  %v1133 = vmul.f32 %v1117, 0.01
  %v1134 = vmul.f32 %v1118, 0.01
  %v1135 = vsel %vm1119, %v1111, %v1127
  %v1136 = vsel %vm1120, %v1112, %v1128
  %v1137 = vsel %vm1121, %v1113, %v1129
  %v1138 = vsel %vm1122, %v1114, %v1130
  %v1139 = vsel %vm1123, %v1115, %v1131
  %v1140 = vsel %vm1124, %v1116, %v1132
  %v1141 = vsel %vm1125, %v1117, %v1133
  %v1142 = vsel %vm1126, %v1118, %v1134
  %v1143 = vlaneseq
  %v1144 = vand.u32 %v1143, 127
  %vm1145 = vcmp.lt.s32.totalorder %v1144, 8
  %v1146 = vsel %vm1145, %v1135, -1e+30
  %v1147 = vsel %vm1145, %v1136, -1e+30
  %v1148 = vsel %vm1145, %v1137, -1e+30
  %v1149 = vsel %vm1145, %v1138, -1e+30
  %v1150 = vsel %vm1145, %v1139, -1e+30
  %v1151 = vsel %vm1145, %v1140, -1e+30
  %v1152 = vsel %vm1145, %v1141, -1e+30
  %v1153 = vsel %vm1145, %v1142, -1e+30
  %1154 = vmax.xlane.f32.xlu0 %v1146
  %v1155 = vpop.xlane.xlu0 %1154
  %1156 = vmax.xlane.f32.xlu0 %v1147
  %v1157 = vpop.xlane.xlu0 %1156
  %1158 = vmax.xlane.f32.xlu0 %v1148
  %v1159 = vpop.xlane.xlu0 %1158
  %1160 = vmax.xlane.f32.xlu0 %v1149
  %v1161 = vpop.xlane.xlu0 %1160
  %1162 = vmax.xlane.f32.xlu0 %v1150
  %v1163 = vpop.xlane.xlu0 %1162
  %1164 = vmax.xlane.f32.xlu0 %v1151
  %v1165 = vpop.xlane.xlu0 %1164
  %1166 = vmax.xlane.f32.xlu0 %v1152
  %v1167 = vpop.xlane.xlu0 %1166
  %1168 = vmax.xlane.f32.xlu0 %v1153
  %v1169 = vpop.xlane.xlu0 %1168
  %v1170 = vsub.f32 %v1146, %v1155
  %v1171 = vsub.f32 %v1147, %v1157
  %v1172 = vsub.f32 %v1148, %v1159
  %v1173 = vsub.f32 %v1149, %v1161
  %v1174 = vsub.f32 %v1150, %v1163
  %v1175 = vsub.f32 %v1151, %v1165
  %v1176 = vsub.f32 %v1152, %v1167
  %v1177 = vsub.f32 %v1153, %v1169
  %v1178 = vmul.f32 %v1170, 1.442695
  %v1179 = vpow.pop %v1178
  %v1180 = vmul.f32 %v1171, 1.442695
  %v1181 = vpow.pop %v1180
  %v1182 = vmul.f32 %v1172, 1.442695
  %v1183 = vpow.pop %v1182
  %v1184 = vmul.f32 %v1173, 1.442695
  %v1185 = vpow.pop %v1184
  %v1186 = vmul.f32 %v1174, 1.442695
  %v1187 = vpow.pop %v1186
  %v1188 = vmul.f32 %v1175, 1.442695
  %v1189 = vpow.pop %v1188
  %v1190 = vmul.f32 %v1176, 1.442695
  %v1191 = vpow.pop %v1190
  %v1192 = vmul.f32 %v1177, 1.442695
  %v1193 = vpow.pop %v1192
  %1194 = vadd.xlane.f32.xlu0 %v1179
  %v1195 = vpop.xlane.xlu0 %1194
  %1196 = vadd.xlane.f32.xlu0 %v1181
  %v1197 = vpop.xlane.xlu0 %1196
  %1198 = vadd.xlane.f32.xlu0 %v1183
  %v1199 = vpop.xlane.xlu0 %1198
  %1200 = vadd.xlane.f32.xlu0 %v1185
  %v1201 = vpop.xlane.xlu0 %1200
  %1202 = vadd.xlane.f32.xlu0 %v1187
  %v1203 = vpop.xlane.xlu0 %1202
  %1204 = vadd.xlane.f32.xlu0 %v1189
  %v1205 = vpop.xlane.xlu0 %1204
  %1206 = vadd.xlane.f32.xlu0 %v1191
  %v1207 = vpop.xlane.xlu0 %1206
  %1208 = vadd.xlane.f32.xlu0 %v1193
  %v1209 = vpop.xlane.xlu0 %1208
  %v1210 = vlog2.pop %v1195
  %v1211 = vmul.f32 %v1210, 0.6931472
  %v1212 = vlog2.pop %v1197
  %v1213 = vmul.f32 %v1212, 0.6931472
  %v1214 = vlog2.pop %v1199
  %v1215 = vmul.f32 %v1214, 0.6931472
  %v1216 = vlog2.pop %v1201
  %v1217 = vmul.f32 %v1216, 0.6931472
  %v1218 = vlog2.pop %v1203
  %v1219 = vmul.f32 %v1218, 0.6931472
  %v1220 = vlog2.pop %v1205
  %v1221 = vmul.f32 %v1220, 0.6931472
  %v1222 = vlog2.pop %v1207
  %v1223 = vmul.f32 %v1222, 0.6931472
  %v1224 = vlog2.pop %v1209
  %v1225 = vmul.f32 %v1224, 0.6931472
  %v1226 = vsub.f32 %v1170, %v1211
  %v1227 = vsub.f32 %v1171, %v1213
  %v1228 = vsub.f32 %v1172, %v1215
  %v1229 = vsub.f32 %v1173, %v1217
  %v1230 = vsub.f32 %v1174, %v1219
  %v1231 = vsub.f32 %v1175, %v1221
  %v1232 = vsub.f32 %v1176, %v1223
  %v1233 = vsub.f32 %v1177, %v1225
  %1234 = vst [vmem:[%s8] sm:$0xff] %v1226
  %1235 = vst [vmem:[%s8 + $0x8] sm:$0xff] %v1227
  %1236 = vst [vmem:[%s8 + $0x10] sm:$0xff] %v1228
  %1237 = vst [vmem:[%s8 + $0x18] sm:$0xff] %v1229
  %1238 = vst [vmem:[%s8 + $0x20] sm:$0xff] %v1230
  %1239 = vst [vmem:[%s8 + $0x28] sm:$0xff] %v1231
  %1240 = vst [vmem:[%s8 + $0x30] sm:$0xff] %v1232
  %1241 = vst [vmem:[%s8 + $0x38] sm:$0xff] %v1233
  // Predicated region
  $region34: #{rnn_sequence.1} parent=0 // pred_check
    _
  $region35: #{rnn_sequence.1} parent=0 // pred_check_branch
    %1243 = sbr.rel (0) target = $region37
  $region36: #{rnn_sequence.1} parent=0 // pred_region
    _
  $region37: #{rnn_sequence.1} parent=0 // pred_fallthru
    _
  // Predicated region
  $region38: #{rnn_sequence.1} parent=0 // pred_check
    _
  $region39: #{rnn_sequence.1} parent=0 // pred_check_branch
    %1245 = sbr.rel (0) target = $region41
  $region40: #{rnn_sequence.1} parent=0 // pred_region
    _
  $region41: #{rnn_sequence.1} parent=0 // pred_fallthru
    _
  // Predicated region
  $region42: #{rnn_sequence.1} parent=0 // pred_check
    _
  $region43: #{rnn_sequence.1} parent=0 // pred_check_branch
    %1247 = sbr.rel (0) target = $region45
  $region44: #{rnn_sequence.1} parent=0 // pred_region
    _
  $region45: #{rnn_sequence.1} parent=0 // pred_fallthru
    _
  // Predicated region
  $region46: #{rnn_sequence.1} parent=0 // pred_check
    _
  $region47: #{rnn_sequence.1} parent=0 // pred_check_branch
    %1249 = sbr.rel (0) target = $region49
  $region48: #{rnn_sequence.1} parent=0 // pred_region
    _
  $region49: #{rnn_sequence.1} parent=0 // pred_fallthru
    _

</llo_original>
